<compile_context>
chip_gen: v7x
topology: tpu7x:2x2x1
jax: 0.10.0
libtpu: 0.0.40
codegen_flags: <defaults>
</compile_context>

<pallas_src>
import math

import jax
import jax.numpy as jnp
from jax import lax
from jax.experimental import pallas as pl
from jax.experimental.pallas import tpu as pltpu

_CompilerParams = getattr(pltpu, "CompilerParams", None)
if _CompilerParams is None:  # very old JAX fallback
    _CompilerParams = getattr(pltpu, "TPUCompilerParams")


def _round_up(a, m):
    return ((a + m - 1) // m) * m


def _fused_layer(x_nchw, w_hwio, gamma, beta, sh, sw, pool, out_dtype):
    """One EncByLayer block, fully fused into a single pallas_call."""
    N, Cin, H, W = map(int, x_nchw.shape)
    kh, kw, _, Cout = map(int, w_hwio.shape)

    # PyTorch "valid" conv / floor pooling sizes.
    HO = (H - kh) // sh + 1
    WO = (W - kw) // sw + 1
    HO2 = HO // pool
    WO2 = WO // pool
    assert HO2 >= 1 and WO2 >= 1, "pool window larger than conv output"
    # Space-to-depth factors that turn the strided conv into a stride-1 conv.
    kh2 = (kh - 1) // sh + 1
    kw2 = (kw - 1) // sw + 1
    C2 = sh * sw * Cin
    T = kh2 * kw2
    K = T * C2                                   # concatenated contraction depth
    # Padded spatial extents of the stride-1 (space-to-depth) view.
    Hp = HO + kh2
    Wp = _round_up(WO + kw2, math.lcm(8, pool))
    M = HO * Wp                                  # flattened conv-output length (lanes)
    Mv = M - (pool - 1) * Wp - (pool - 1)        # extent of the shifted-max array
    P = HO2 * WO2                                # pooled output length (lanes)
    assert (kh2 - 1) * Wp + (kw2 - 1) + M <= Hp * Wp

    # ---- JAX-side prep (tiny; stride-1 layers: pad only, no transpose) ------
    if sh == 1 and sw == 1:
        xp = jnp.pad(x_nchw, ((0, 0), (0, 0), (0, Hp - H), (0, Wp - W)))
        x_t = xp.reshape(N, C2, Hp * Wp).astype(jnp.bfloat16)
    else:
        xp = jnp.pad(x_nchw, ((0, 0), (0, 0), (0, Hp * sh - H), (0, Wp * sw - W)))
        x_t = (xp.reshape(N, Cin, Hp, sh, Wp, sw)
                 .transpose(0, 3, 5, 1, 2, 4)            # (N, a, b, c, Hp, Wp)
                 .reshape(N, C2, Hp * Wp)
                 .astype(jnp.bfloat16))
    # Tap-concatenated weights, transposed so the conv result is (Cout, spatial).
    wpad = jnp.pad(w_hwio, ((0, kh2 * sh - kh), (0, kw2 * sw - kw), (0, 0), (0, 0)))
    w_cat = (wpad.reshape(kh2, sh, kw2, sw, Cin, Cout)
                 .transpose(0, 2, 1, 3, 4, 5)            # (ph, qw, a, b, c, co)
                 .reshape(K, Cout).T                     # (Cout, K)
                 .astype(jnp.bfloat16))
    # 0/1 mask of the valid conv-output columns inside each padded row (for BN stats).
    colmask = ((jnp.arange(M, dtype=jnp.int32) % Wp) < WO).astype(jnp.float32).reshape(1, M)
    # 0/1 selection matrix: picks lane j = (h2*pool)*Wp + w2*pool out of the
    # shifted-max array -> one MXU matmul does the pooled "gather" lane-densely.
    rowsel = (jnp.arange(HO2, dtype=jnp.int32)[:, None] * (pool * Wp)
              + jnp.arange(WO2, dtype=jnp.int32)[None, :] * pool).reshape(P)
    sel = (jnp.arange(Mv, dtype=jnp.int32)[:, None] == rowsel[None, :]).astype(jnp.float32)
    g2 = gamma.reshape(Cout, 1).astype(jnp.float32)
    b2 = beta.reshape(Cout, 1).astype(jnp.float32)

    taps = [(ph, qw) for ph in range(kh2) for qw in range(kw2)]
    inv_cnt = 1.0 / float(N * HO * WO)

    def kernel(x_ref, w_ref, m_ref, sel_ref, g_ref, b_ref, o_ref, y_buf, rhs_buf):
        mask = m_ref[...]                                  # (1, M) f32 0/1

        # --- phase 1: conv (single concatenated-K matmul per sample) + stats.
        def conv_body(n, carry):
            s, q = carry
            xv = x_ref[n]                                  # (C2, Hp*Wp) bf16
            for t, (ph, qw) in enumerate(taps):            # assemble im2col RHS in VMEM
                off = ph * Wp + qw
                rhs_buf[pl.ds(t * C2, C2), :] = xv[:, off:off + M]
            acc = jnp.dot(w_ref[...], rhs_buf[...],
                          preferred_element_type=jnp.float32)   # (Cout, M) f32
            y_buf[n] = acc
            accm = acc * mask                              # drop junk (padded) columns
            s = s + jnp.sum(accm, axis=1, keepdims=True)
            q = q + jnp.sum(accm * acc, axis=1, keepdims=True)
            return s, q

        zeros = jnp.zeros((Cout, 1), jnp.float32)
        ssum, sqsum = lax.fori_loop(0, N, conv_body, (zeros, zeros))

        # --- phase 2: batch statistics -> BN affine.  (Conv bias cancels exactly
        # under training-mode BN, so it is folded away; stats are bias-free.)
        mean = ssum * inv_cnt
        var = jnp.maximum(sqsum * inv_cnt - mean * mean, 0.0)
        scale = g_ref[...] * lax.rsqrt(var + 1e-5)          # (Cout, 1)
        shift = b_ref[...] - mean * scale

        # --- phase 3: BN affine -> MaxPool -> LeakyReLU -> store (lane-dense).
        def out_body(n, dummy):
            v = y_buf[n] * scale + shift                    # (Cout, M) f32
            vm = v[:, 0:Mv]                                 # p*p shifted maxima
            for a in range(pool):
                for b in range(pool):
                    if a == 0 and b == 0:
                        continue
                    off = a * Wp + b
                    vm = jnp.maximum(vm, v[:, off:off + Mv])
            pooled = jnp.dot(vm, sel_ref[...],
                             preferred_element_type=jnp.float32)  # (Cout, P)
            act = jnp.where(pooled >= 0.0, pooled, 0.3 * pooled)  # LeakyReLU(0.3)
            o_ref[n] = act.astype(o_ref.dtype)              # one full-width store
            return dummy

        lax.fori_loop(0, N, out_body, jnp.int32(0))

    # ---- VMEM budget (explicit, sized against v7x's 64 MiB physical) --------
    out_itemsize = jnp.dtype(out_dtype).itemsize
    est = (x_t.size * 2 + w_cat.size * 2 + colmask.size * 4 + sel.size * 4
           + 2 * Cout * 4 + N * Cout * P * out_itemsize
           + N * Cout * M * 4 + K * M * 2)
    assert est < (40 << 20), (
        "batch does not fit the fully-fused layer in VMEM; "
        "TODO(synk): add a batch-chunked two-pass fallback")
    vmem_limit = int(min(max(2 * est + (8 << 20), 32 << 20), 60 << 20))

    out = pl.pallas_call(
        kernel,
        out_shape=jax.ShapeDtypeStruct((N, Cout, P), out_dtype),
        grid_spec=pltpu.PrefetchScalarGridSpec(
            num_scalar_prefetch=0,
            grid=(1,),
            in_specs=[
                pl.BlockSpec((N, C2, Hp * Wp), lambda i: (0, 0, 0)),
                pl.BlockSpec((Cout, K), lambda i: (0, 0)),
                pl.BlockSpec((1, M), lambda i: (0, 0)),
                pl.BlockSpec((Mv, P), lambda i: (0, 0)),
                pl.BlockSpec((Cout, 1), lambda i: (0, 0)),
                pl.BlockSpec((Cout, 1), lambda i: (0, 0)),
            ],
            out_specs=pl.BlockSpec((N, Cout, P), lambda i: (0, 0, 0)),
            scratch_shapes=[
                pltpu.VMEM((N, Cout, M), jnp.float32),      # pre-pool conv result
                pltpu.VMEM((K, M), jnp.bfloat16),           # tap-concatenated RHS
            ],
        ),
        compiler_params=_CompilerParams(
            dimension_semantics=("arbitrary",),
            vmem_limit_bytes=vmem_limit),
    )(x_t, w_cat, colmask, sel, g2, b2)
    return out.reshape(N, Cout, HO2, WO2)


class EncByLayerPallas:
    """Pallas-TPU forward-pass equivalent of the PyTorch EncByLayer module."""

    def __init__(self, x_filters, y_filters, x_strides, y_strides, max_pools,
                 verbose=False, key=None):
        num_layers = len(x_filters)
        assert all(len(v) == num_layers
                   for v in (y_filters, x_strides, y_strides, max_pools))
        self.verbose = verbose
        ncvs = [1] + [4 * 2 ** i for i in range(num_layers)]
        if key is None:
            key = jax.random.PRNGKey(0)
        self.cfgs, self.params = [], []
        for i in range(num_layers):
            cin, cout = ncvs[i], ncvs[i + 1]
            kh, kw = int(x_filters[i]), int(y_filters[i])
            sh, sw = int(x_strides[i]), int(y_strides[i])
            key, k1, k2, k3, k4 = jax.random.split(key, 5)
            fan_in = cin * kh * kw
            w = jax.random.normal(k1, (kh, kw, cin, cout), jnp.float32) / math.sqrt(fan_in)
            b = 0.1 * jax.random.normal(k2, (cout,), jnp.float32)
            gamma = 1.0 + 0.1 * jax.random.normal(k3, (cout,), jnp.float32)
            beta = 0.1 * jax.random.normal(k4, (cout,), jnp.float32)
            self.cfgs.append(dict(kh=kh, kw=kw, sh=sh, sw=sw, pool=int(max_pools[i])))
            self.params.append(dict(w=w, b=b, gamma=gamma, beta=beta))

    def __call__(self, x_nchw):
        if self.verbose:
            print(x_nchw.shape)
        x = x_nchw                                       # NCHW throughout
        num_layers = len(self.cfgs)
        for li, (cfg, prm) in enumerate(zip(self.cfgs, self.params)):
            out_dtype = jnp.float32 if li == num_layers - 1 else jnp.bfloat16
            x = _fused_layer(x, prm["w"], prm["gamma"], prm["beta"],
                             cfg["sh"], cfg["sw"], cfg["pool"], out_dtype)
            if self.verbose:
                print(x.shape)
        return x


def reference_forward(x_nchw, params, cfgs):
    """Plain-JAX (XLA) reference with PyTorch semantics, for verification."""
    x = x_nchw.astype(jnp.float32)
    for cfg, prm in zip(cfgs, params):
        sh, sw, p = cfg["sh"], cfg["sw"], cfg["pool"]
        y = jax.lax.conv_general_dilated(
            x, prm["w"], window_strides=(sh, sw), padding="VALID",
            dimension_numbers=("NCHW", "HWIO", "NCHW"))
        y = y + prm["b"].reshape(1, -1, 1, 1)
        mean = jnp.mean(y, axis=(0, 2, 3), keepdims=True)
        var = jnp.mean(jnp.square(y - mean), axis=(0, 2, 3), keepdims=True)
        y = (y - mean) * jax.lax.rsqrt(var + 1e-5)
        y = y * prm["gamma"].reshape(1, -1, 1, 1) + prm["beta"].reshape(1, -1, 1, 1)
        y = jnp.where(y >= 0.0, y, 0.3 * y)
        n, c, hh, ww = y.shape
        h2, w2 = hh // p, ww // p
        y = y[:, :, : h2 * p, : w2 * p].reshape(n, c, h2, p, w2, p)
        x = jnp.max(y, axis=(3, 5))
    return x


if __name__ == "__main__":
    key = jax.random.PRNGKey(0)
    k_in, k_par = jax.random.split(key)
    # Small HAR-CNN-like config: channels 1 -> 4 -> 8 -> 16.
    x = jax.random.normal(k_in, (2, 1, 28, 28), jnp.float32)      # NCHW
    model = EncByLayerPallas(
        x_filters=(3, 3, 2), y_filters=(3, 3, 2),
        x_strides=(1, 2, 1), y_strides=(1, 2, 1),
        max_pools=(2, 2, 1), verbose=False, key=k_par)

    out = jax.jit(model.__call__)(x)
    out = jax.block_until_ready(out)

    ref = jax.block_until_ready(reference_forward(x, model.params, model.cfgs))
    assert out.shape == ref.shape == (2, 16, 2, 2), (out.shape, ref.shape)
    # Tolerance is loose on purpose: conv operands are bf16 and inter-layer
    # activations are bf16 (BN-normalized values are O(1), so this is ~%-level).
    max_diff = float(jnp.max(jnp.abs(out - ref)))
    assert math.isfinite(max_diff) and max_diff < 0.3, max_diff
    print("KERNEL_OK")
</pallas_src>

<mosaic_0001>
module attributes {stable_mosaic.version = 11 : i64} {
  func.func @kernel(%arg0: i32, %arg1: memref<2x1x928xbf16, #tpu.memory_space<vmem>>, %arg2: memref<4x9xbf16, #tpu.memory_space<vmem>>, %arg3: memref<1x832xf32, #tpu.memory_space<vmem>>, %arg4: memref<799x169xf32, #tpu.memory_space<vmem>>, %arg5: memref<4x1xf32, #tpu.memory_space<vmem>>, %arg6: memref<4x1xf32, #tpu.memory_space<vmem>>, %arg7: memref<2x4x169xbf16, #tpu.memory_space<vmem>>, %arg8: memref<2x4x832xf32, #tpu.memory_space<vmem>>, %arg9: memref<9x832xbf16, #tpu.memory_space<vmem>>) attributes {dimension_semantics = [#tpu.dimension_semantics<arbitrary>], iteration_bounds = array<i64: 1>, scalar_prefetch = 0 : i64, scratch_operands = 2 : i64, tpu.core_type = #tpu.core_type<tc>, window_params = [{pipeline_mode = #tpu.pipeline_mode<synchronous>, transform_indices = @transform_0, window_bounds = array<i64: 2, 1, 928>}, {pipeline_mode = #tpu.pipeline_mode<synchronous>, transform_indices = @transform_1, window_bounds = array<i64: 4, 9>}, {pipeline_mode = #tpu.pipeline_mode<synchronous>, transform_indices = @transform_2, window_bounds = array<i64: 1, 832>}, {pipeline_mode = #tpu.pipeline_mode<synchronous>, transform_indices = @transform_3, window_bounds = array<i64: 799, 169>}, {pipeline_mode = #tpu.pipeline_mode<synchronous>, transform_indices = @transform_4, window_bounds = array<i64: 4, 1>}, {pipeline_mode = #tpu.pipeline_mode<synchronous>, transform_indices = @transform_5, window_bounds = array<i64: 4, 1>}, {pipeline_mode = #tpu.pipeline_mode<synchronous>, transform_indices = @transform_6, window_bounds = array<i64: 2, 4, 169>}]} {
    %c0 = arith.constant 0 : index
    %c0_0 = arith.constant 0 : index
    %0 = vector.load %arg3[%c0, %c0_0] : memref<1x832xf32, #tpu.memory_space<vmem>>, vector<1x832xf32>
    %cst = arith.constant 0.000000e+00 : f32
    %1 = vector.broadcast %cst : f32 to vector<4x1xf32>
    %c0_i32 = arith.constant 0 : i32
    %c2_i32 = arith.constant 2 : i32
    %2 = arith.addi %c0_i32, %c2_i32 : i32
    %c1_i32 = arith.constant 1 : i32
    %3:2 = scf.for %arg10 = %c0_i32 to %2 step %c1_i32 iter_args(%arg11 = %1, %arg12 = %1) -> (vector<4x1xf32>, vector<4x1xf32>)  : i32 {
      %21 = arith.index_cast %arg10 : i32 to index
      %c0_14 = arith.constant 0 : index
      %c0_15 = arith.constant 0 : index
      %22 = vector.load %arg1[%21, %c0_14, %c0_15] : memref<2x1x928xbf16, #tpu.memory_space<vmem>>, vector<1x1x928xbf16>
      %23 = vector.shape_cast %22 : vector<1x1x928xbf16> to vector<1x928xbf16>
      %24 = vector.extract_strided_slice %23 {offsets = [0, 0], sizes = [1, 832], strides = [1, 1]} : vector<1x928xbf16> to vector<1x832xbf16>
      %c0_16 = arith.constant 0 : index
      %c0_17 = arith.constant 0 : index
      %25 = vector.load %arg9[%c0_16, %c0_17] : memref<9x832xbf16, #tpu.memory_space<vmem>>, vector<1x832xbf16>
      tpu.vector_store %arg9[%c0_16, %c0_17], %24 {strides = array<i32>} : memref<9x832xbf16, #tpu.memory_space<vmem>>, vector<1x832xbf16>,
      %26 = vector.extract_strided_slice %23 {offsets = [0, 1], sizes = [1, 832], strides = [1, 1]} : vector<1x928xbf16> to vector<1x832xbf16>
      %c1 = arith.constant 1 : index
      %c0_18 = arith.constant 0 : index
      %27 = vector.load %arg9[%c1, %c0_18] : memref<9x832xbf16, #tpu.memory_space<vmem>>, vector<1x832xbf16>
      tpu.vector_store %arg9[%c1, %c0_18], %26 {strides = array<i32>} : memref<9x832xbf16, #tpu.memory_space<vmem>>, vector<1x832xbf16>,
      %28 = vector.extract_strided_slice %23 {offsets = [0, 2], sizes = [1, 832], strides = [1, 1]} : vector<1x928xbf16> to vector<1x832xbf16>
      %c2 = arith.constant 2 : index
      %c0_19 = arith.constant 0 : index
      %29 = vector.load %arg9[%c2, %c0_19] : memref<9x832xbf16, #tpu.memory_space<vmem>>, vector<1x832xbf16>
      tpu.vector_store %arg9[%c2, %c0_19], %28 {strides = array<i32>} : memref<9x832xbf16, #tpu.memory_space<vmem>>, vector<1x832xbf16>,
      %30 = vector.extract_strided_slice %23 {offsets = [0, 32], sizes = [1, 832], strides = [1, 1]} : vector<1x928xbf16> to vector<1x832xbf16>
      %c3 = arith.constant 3 : index
      %c0_20 = arith.constant 0 : index
      %31 = vector.load %arg9[%c3, %c0_20] : memref<9x832xbf16, #tpu.memory_space<vmem>>, vector<1x832xbf16>
      tpu.vector_store %arg9[%c3, %c0_20], %30 {strides = array<i32>} : memref<9x832xbf16, #tpu.memory_space<vmem>>, vector<1x832xbf16>,
      %32 = vector.extract_strided_slice %23 {offsets = [0, 33], sizes = [1, 832], strides = [1, 1]} : vector<1x928xbf16> to vector<1x832xbf16>
      %c4 = arith.constant 4 : index
      %c0_21 = arith.constant 0 : index
      %33 = vector.load %arg9[%c4, %c0_21] : memref<9x832xbf16, #tpu.memory_space<vmem>>, vector<1x832xbf16>
      tpu.vector_store %arg9[%c4, %c0_21], %32 {strides = array<i32>} : memref<9x832xbf16, #tpu.memory_space<vmem>>, vector<1x832xbf16>,
      %34 = vector.extract_strided_slice %23 {offsets = [0, 34], sizes = [1, 832], strides = [1, 1]} : vector<1x928xbf16> to vector<1x832xbf16>
      %c5 = arith.constant 5 : index
      %c0_22 = arith.constant 0 : index
      %35 = vector.load %arg9[%c5, %c0_22] : memref<9x832xbf16, #tpu.memory_space<vmem>>, vector<1x832xbf16>
      tpu.vector_store %arg9[%c5, %c0_22], %34 {strides = array<i32>} : memref<9x832xbf16, #tpu.memory_space<vmem>>, vector<1x832xbf16>,
      %36 = vector.extract_strided_slice %23 {offsets = [0, 64], sizes = [1, 832], strides = [1, 1]} : vector<1x928xbf16> to vector<1x832xbf16>
      %c6 = arith.constant 6 : index
      %c0_23 = arith.constant 0 : index
      %37 = vector.load %arg9[%c6, %c0_23] : memref<9x832xbf16, #tpu.memory_space<vmem>>, vector<1x832xbf16>
      tpu.vector_store %arg9[%c6, %c0_23], %36 {strides = array<i32>} : memref<9x832xbf16, #tpu.memory_space<vmem>>, vector<1x832xbf16>,
      %38 = vector.extract_strided_slice %23 {offsets = [0, 65], sizes = [1, 832], strides = [1, 1]} : vector<1x928xbf16> to vector<1x832xbf16>
      %c7 = arith.constant 7 : index
      %c0_24 = arith.constant 0 : index
      %39 = vector.load %arg9[%c7, %c0_24] : memref<9x832xbf16, #tpu.memory_space<vmem>>, vector<1x832xbf16>
      tpu.vector_store %arg9[%c7, %c0_24], %38 {strides = array<i32>} : memref<9x832xbf16, #tpu.memory_space<vmem>>, vector<1x832xbf16>,
      %40 = vector.extract_strided_slice %23 {offsets = [0, 66], sizes = [1, 832], strides = [1, 1]} : vector<1x928xbf16> to vector<1x832xbf16>
      %c8 = arith.constant 8 : index
      %c0_25 = arith.constant 0 : index
      %41 = vector.load %arg9[%c8, %c0_25] : memref<9x832xbf16, #tpu.memory_space<vmem>>, vector<1x832xbf16>
      tpu.vector_store %arg9[%c8, %c0_25], %40 {strides = array<i32>} : memref<9x832xbf16, #tpu.memory_space<vmem>>, vector<1x832xbf16>,
      %c0_26 = arith.constant 0 : index
      %c0_27 = arith.constant 0 : index
      %42 = vector.load %arg2[%c0_26, %c0_27] : memref<4x9xbf16, #tpu.memory_space<vmem>>, vector<4x9xbf16>
      %c0_28 = arith.constant 0 : index
      %c0_29 = arith.constant 0 : index
      %43 = vector.load %arg9[%c0_28, %c0_29] : memref<9x832xbf16, #tpu.memory_space<vmem>>, vector<9x832xbf16>
      %cst_30 = arith.constant dense<0.000000e+00> : vector<4x832xf32>
      %44 = tpu.matmul %42, %43, %cst_30 {dimension_numbers = #tpu.dot_dimension_numbers<[1], [0], [0], [1], [0, 0, 1, 1], [], []>} : vector<4x9xbf16>, vector<9x832xbf16>, vector<4x832xf32> -> vector<4x832xf32>
      %45 = arith.index_cast %arg10 : i32 to index
      %c0_31 = arith.constant 0 : index
      %c0_32 = arith.constant 0 : index
      %46 = vector.load %arg8[%45, %c0_31, %c0_32] : memref<2x4x832xf32, #tpu.memory_space<vmem>>, vector<1x4x832xf32>
      %47 = vector.shape_cast %46 : vector<1x4x832xf32> to vector<4x832xf32>
      %48 = vector.shape_cast %44 : vector<4x832xf32> to vector<1x4x832xf32>
      tpu.vector_store %arg8[%45, %c0_31, %c0_32], %48 {strides = array<i32>} : memref<2x4x832xf32, #tpu.memory_space<vmem>>, vector<1x4x832xf32>,
      %49 = vector.broadcast %0 : vector<1x832xf32> to vector<4x832xf32>
      %50 = arith.mulf %44, %49 : vector<4x832xf32>
      %cst_33 = arith.constant dense<0.000000e+00> : vector<4xf32>
      %51 = vector.multi_reduction <add>, %50, %cst_33 [1] : vector<4x832xf32> to vector<4xf32>
      %52 = vector.shape_cast %51 : vector<4xf32> to vector<4x1xf32>
      %53 = arith.addf %arg11, %52 : vector<4x1xf32>
      %54 = arith.mulf %50, %44 : vector<4x832xf32>
      %cst_34 = arith.constant dense<0.000000e+00> : vector<4xf32>
      %55 = vector.multi_reduction <add>, %54, %cst_34 [1] : vector<4x832xf32> to vector<4xf32>
      %56 = vector.shape_cast %55 : vector<4xf32> to vector<4x1xf32>
      %57 = arith.addf %arg12, %56 : vector<4x1xf32>
      scf.yield %53, %57 : vector<4x1xf32>, vector<4x1xf32>
    }
    %c2_i32_1 = arith.constant 2 : i32
    %cst_2 = arith.constant 7.396450e-04 : f32
    %4 = vector.broadcast %cst_2 : f32 to vector<4x1xf32>
    %5 = arith.mulf %3#0, %4 : vector<4x1xf32>
    %cst_3 = arith.constant 7.396450e-04 : f32
    %6 = vector.broadcast %cst_3 : f32 to vector<4x1xf32>
    %7 = arith.mulf %3#1, %6 : vector<4x1xf32>
    %8 = arith.mulf %5, %5 : vector<4x1xf32>
    %9 = arith.subf %7, %8 : vector<4x1xf32>
    %cst_4 = arith.constant 0.000000e+00 : f32
    %10 = vector.broadcast %cst_4 : f32 to vector<4x1xf32>
    %11 = arith.maximumf %9, %10 : vector<4x1xf32>
    %c0_5 = arith.constant 0 : index
    %c0_6 = arith.constant 0 : index
    %12 = vector.load %arg5[%c0_5, %c0_6] : memref<4x1xf32, #tpu.memory_space<vmem>>, vector<4x1xf32>
    %cst_7 = arith.constant 9.99999974E-6 : f32
    %13 = vector.broadcast %cst_7 : f32 to vector<4x1xf32>
    %14 = arith.addf %11, %13 : vector<4x1xf32>
    %15 = math.rsqrt %14 : vector<4x1xf32>
    %16 = arith.mulf %12, %15 : vector<4x1xf32>
    %c0_8 = arith.constant 0 : index
    %c0_9 = arith.constant 0 : index
    %17 = vector.load %arg6[%c0_8, %c0_9] : memref<4x1xf32, #tpu.memory_space<vmem>>, vector<4x1xf32>
    %18 = arith.mulf %5, %16 : vector<4x1xf32>
    %19 = arith.subf %17, %18 : vector<4x1xf32>
    %c0_i32_10 = arith.constant 0 : i32
    %c2_i32_11 = arith.constant 2 : i32
    %20 = arith.addi %c0_i32_10, %c2_i32_11 : i32
    %c1_i32_12 = arith.constant 1 : i32
    scf.for %arg10 = %c0_i32_10 to %20 step %c1_i32_12  : i32 {
      %21 = arith.index_cast %arg10 : i32 to index
      %c0_14 = arith.constant 0 : index
      %c0_15 = arith.constant 0 : index
      %22 = vector.load %arg8[%21, %c0_14, %c0_15] : memref<2x4x832xf32, #tpu.memory_space<vmem>>, vector<1x4x832xf32>
      %23 = vector.shape_cast %22 : vector<1x4x832xf32> to vector<4x832xf32>
      %24 = vector.broadcast %16 : vector<4x1xf32> to vector<4x832xf32>
      %25 = arith.mulf %23, %24 : vector<4x832xf32>
      %26 = vector.broadcast %19 : vector<4x1xf32> to vector<4x832xf32>
      %27 = arith.addf %25, %26 : vector<4x832xf32>
      %28 = vector.extract_strided_slice %27 {offsets = [0, 0], sizes = [4, 799], strides = [1, 1]} : vector<4x832xf32> to vector<4x799xf32>
      %29 = vector.extract_strided_slice %27 {offsets = [0, 1], sizes = [4, 799], strides = [1, 1]} : vector<4x832xf32> to vector<4x799xf32>
      %30 = arith.maximumf %28, %29 : vector<4x799xf32>
      %31 = vector.extract_strided_slice %27 {offsets = [0, 32], sizes = [4, 799], strides = [1, 1]} : vector<4x832xf32> to vector<4x799xf32>
      %32 = arith.maximumf %30, %31 : vector<4x799xf32>
      %33 = vector.extract_strided_slice %27 {offsets = [0, 33], sizes = [4, 799], strides = [1, 1]} : vector<4x832xf32> to vector<4x799xf32>
      %34 = arith.maximumf %32, %33 : vector<4x799xf32>
      %c0_16 = arith.constant 0 : index
      %c0_17 = arith.constant 0 : index
      %35 = vector.load %arg4[%c0_16, %c0_17] : memref<799x169xf32, #tpu.memory_space<vmem>>, vector<799x169xf32>
      %cst_18 = arith.constant dense<0.000000e+00> : vector<4x169xf32>
      %36 = tpu.matmul %34, %35, %cst_18 {dimension_numbers = #tpu.dot_dimension_numbers<[1], [0], [0], [1], [0, 0, 1, 1], [], []>} : vector<4x799xf32>, vector<799x169xf32>, vector<4x169xf32> -> vector<4x169xf32>
      %cst_19 = arith.constant 0.000000e+00 : f32
      %37 = vector.broadcast %cst_19 : f32 to vector<4x169xf32>
      %38 = arith.cmpf oge, %36, %37 : vector<4x169xf32>
      %cst_20 = arith.constant 3.000000e-01 : f32
      %39 = vector.broadcast %cst_20 : f32 to vector<4x169xf32>
      %40 = arith.mulf %39, %36 : vector<4x169xf32>
      %41 = arith.select %38, %36, %40 : vector<4x169xi1>, vector<4x169xf32>
      %42 = arith.truncf %41 : vector<4x169xf32> to vector<4x169xbf16>
      %43 = arith.index_cast %arg10 : i32 to index
      %c0_21 = arith.constant 0 : index
      %c0_22 = arith.constant 0 : index
      %44 = vector.load %arg7[%43, %c0_21, %c0_22] : memref<2x4x169xbf16, #tpu.memory_space<vmem>>, vector<1x4x169xbf16>
      %45 = vector.shape_cast %44 : vector<1x4x169xbf16> to vector<4x169xbf16>
      %46 = vector.shape_cast %42 : vector<4x169xbf16> to vector<1x4x169xbf16>
      tpu.vector_store %arg7[%43, %c0_21, %c0_22], %46 {strides = array<i32>} : memref<2x4x169xbf16, #tpu.memory_space<vmem>>, vector<1x4x169xbf16>,
    }
    %c2_i32_13 = arith.constant 2 : i32
    return
  }
  func.func @transform_0(%arg0: i32) -> (i32, i32, i32) {
    %c0_i32 = arith.constant 0 : i32
    %c0_i32_0 = arith.constant 0 : i32
    %c0_i32_1 = arith.constant 0 : i32
    %c0_i32_2 = arith.constant 0 : i32
    return %c0_i32, %c0_i32_0, %c0_i32_1 : i32, i32, i32
  }
  func.func @transform_1(%arg0: i32) -> (i32, i32) {
    %c0_i32 = arith.constant 0 : i32
    %c0_i32_0 = arith.constant 0 : i32
    %c0_i32_1 = arith.constant 0 : i32
    return %c0_i32, %c0_i32_0 : i32, i32
  }
  func.func @transform_2(%arg0: i32) -> (i32, i32) {
    %c0_i32 = arith.constant 0 : i32
    %c0_i32_0 = arith.constant 0 : i32
    %c0_i32_1 = arith.constant 0 : i32
    return %c0_i32, %c0_i32_0 : i32, i32
  }
  func.func @transform_3(%arg0: i32) -> (i32, i32) {
    %c0_i32 = arith.constant 0 : i32
    %c0_i32_0 = arith.constant 0 : i32
    %c0_i32_1 = arith.constant 0 : i32
    return %c0_i32, %c0_i32_0 : i32, i32
  }
  func.func @transform_4(%arg0: i32) -> (i32, i32) {
    %c0_i32 = arith.constant 0 : i32
    %c0_i32_0 = arith.constant 0 : i32
    %c0_i32_1 = arith.constant 0 : i32
    return %c0_i32, %c0_i32_0 : i32, i32
  }
  func.func @transform_5(%arg0: i32) -> (i32, i32) {
    %c0_i32 = arith.constant 0 : i32
    %c0_i32_0 = arith.constant 0 : i32
    %c0_i32_1 = arith.constant 0 : i32
    return %c0_i32, %c0_i32_0 : i32, i32
  }
  func.func @transform_6(%arg0: i32) -> (i32, i32, i32) {
    %c0_i32 = arith.constant 0 : i32
    %c0_i32_0 = arith.constant 0 : i32
    %c0_i32_1 = arith.constant 0 : i32
    %c0_i32_2 = arith.constant 0 : i32
    return %c0_i32, %c0_i32_0, %c0_i32_1 : i32, i32, i32
  }
}

module attributes {stable_mosaic.version = 11 : i64} {
  func.func @kernel(%arg0: i32, %arg1: memref<2x16x64xbf16, #tpu.memory_space<vmem>>, %arg2: memref<8x64xbf16, #tpu.memory_space<vmem>>, %arg3: memref<1x48xf32, #tpu.memory_space<vmem>>, %arg4: memref<39x9xf32, #tpu.memory_space<vmem>>, %arg5: memref<8x1xf32, #tpu.memory_space<vmem>>, %arg6: memref<8x1xf32, #tpu.memory_space<vmem>>, %arg7: memref<2x8x9xbf16, #tpu.memory_space<vmem>>, %arg8: memref<2x8x48xf32, #tpu.memory_space<vmem>>, %arg9: memref<64x48xbf16, #tpu.memory_space<vmem>>) attributes {dimension_semantics = [#tpu.dimension_semantics<arbitrary>], iteration_bounds = array<i64: 1>, scalar_prefetch = 0 : i64, scratch_operands = 2 : i64, tpu.core_type = #tpu.core_type<tc>, window_params = [{pipeline_mode = #tpu.pipeline_mode<synchronous>, transform_indices = @transform_0, window_bounds = array<i64: 2, 16, 64>}, {pipeline_mode = #tpu.pipeline_mode<synchronous>, transform_indices = @transform_1, window_bounds = array<i64: 8, 64>}, {pipeline_mode = #tpu.pipeline_mode<synchronous>, transform_indices = @transform_2, window_bounds = array<i64: 1, 48>}, {pipeline_mode = #tpu.pipeline_mode<synchronous>, transform_indices = @transform_3, window_bounds = array<i64: 39, 9>}, {pipeline_mode = #tpu.pipeline_mode<synchronous>, transform_indices = @transform_4, window_bounds = array<i64: 8, 1>}, {pipeline_mode = #tpu.pipeline_mode<synchronous>, transform_indices = @transform_5, window_bounds = array<i64: 8, 1>}, {pipeline_mode = #tpu.pipeline_mode<synchronous>, transform_indices = @transform_6, window_bounds = array<i64: 2, 8, 9>}]} {
    %c0 = arith.constant 0 : index
    %c0_0 = arith.constant 0 : index
    %0 = vector.load %arg3[%c0, %c0_0] : memref<1x48xf32, #tpu.memory_space<vmem>>, vector<1x48xf32>
    %cst = arith.constant 0.000000e+00 : f32
    %1 = vector.broadcast %cst : f32 to vector<8x1xf32>
    %c0_i32 = arith.constant 0 : i32
    %c2_i32 = arith.constant 2 : i32
    %2 = arith.addi %c0_i32, %c2_i32 : i32
    %c1_i32 = arith.constant 1 : i32
    %3:2 = scf.for %arg10 = %c0_i32 to %2 step %c1_i32 iter_args(%arg11 = %1, %arg12 = %1) -> (vector<8x1xf32>, vector<8x1xf32>)  : i32 {
      %21 = arith.index_cast %arg10 : i32 to index
      %c0_14 = arith.constant 0 : index
      %c0_15 = arith.constant 0 : index
      %22 = vector.load %arg1[%21, %c0_14, %c0_15] : memref<2x16x64xbf16, #tpu.memory_space<vmem>>, vector<1x16x64xbf16>
      %23 = vector.shape_cast %22 : vector<1x16x64xbf16> to vector<16x64xbf16>
      %24 = vector.extract_strided_slice %23 {offsets = [0, 0], sizes = [16, 48], strides = [1, 1]} : vector<16x64xbf16> to vector<16x48xbf16>
      %c0_16 = arith.constant 0 : index
      %c0_17 = arith.constant 0 : index
      %25 = vector.load %arg9[%c0_16, %c0_17] : memref<64x48xbf16, #tpu.memory_space<vmem>>, vector<16x48xbf16>
      tpu.vector_store %arg9[%c0_16, %c0_17], %24 {strides = array<i32>} : memref<64x48xbf16, #tpu.memory_space<vmem>>, vector<16x48xbf16>,
      %26 = vector.extract_strided_slice %23 {offsets = [0, 1], sizes = [16, 48], strides = [1, 1]} : vector<16x64xbf16> to vector<16x48xbf16>
      %c16 = arith.constant 16 : index
      %c0_18 = arith.constant 0 : index
      %27 = vector.load %arg9[%c16, %c0_18] : memref<64x48xbf16, #tpu.memory_space<vmem>>, vector<16x48xbf16>
      tpu.vector_store %arg9[%c16, %c0_18], %26 {strides = array<i32>} : memref<64x48xbf16, #tpu.memory_space<vmem>>, vector<16x48xbf16>,
      %28 = vector.extract_strided_slice %23 {offsets = [0, 8], sizes = [16, 48], strides = [1, 1]} : vector<16x64xbf16> to vector<16x48xbf16>
      %c32 = arith.constant 32 : index
      %c0_19 = arith.constant 0 : index
      %29 = vector.load %arg9[%c32, %c0_19] : memref<64x48xbf16, #tpu.memory_space<vmem>>, vector<16x48xbf16>
      tpu.vector_store %arg9[%c32, %c0_19], %28 {strides = array<i32>} : memref<64x48xbf16, #tpu.memory_space<vmem>>, vector<16x48xbf16>,
      %30 = vector.extract_strided_slice %23 {offsets = [0, 9], sizes = [16, 48], strides = [1, 1]} : vector<16x64xbf16> to vector<16x48xbf16>
      %c48 = arith.constant 48 : index
      %c0_20 = arith.constant 0 : index
      %31 = vector.load %arg9[%c48, %c0_20] : memref<64x48xbf16, #tpu.memory_space<vmem>>, vector<16x48xbf16>
      tpu.vector_store %arg9[%c48, %c0_20], %30 {strides = array<i32>} : memref<64x48xbf16, #tpu.memory_space<vmem>>, vector<16x48xbf16>,
      %c0_21 = arith.constant 0 : index
      %c0_22 = arith.constant 0 : index
      %32 = vector.load %arg2[%c0_21, %c0_22] : memref<8x64xbf16, #tpu.memory_space<vmem>>, vector<8x64xbf16>
      %c0_23 = arith.constant 0 : index
      %c0_24 = arith.constant 0 : index
      %33 = vector.load %arg9[%c0_23, %c0_24] : memref<64x48xbf16, #tpu.memory_space<vmem>>, vector<64x48xbf16>
      %cst_25 = arith.constant dense<0.000000e+00> : vector<8x48xf32>
      %34 = tpu.matmul %32, %33, %cst_25 {dimension_numbers = #tpu.dot_dimension_numbers<[1], [0], [0], [1], [0, 0, 1, 1], [], []>} : vector<8x64xbf16>, vector<64x48xbf16>, vector<8x48xf32> -> vector<8x48xf32>
      %35 = arith.index_cast %arg10 : i32 to index
      %c0_26 = arith.constant 0 : index
      %c0_27 = arith.constant 0 : index
      %36 = vector.load %arg8[%35, %c0_26, %c0_27] : memref<2x8x48xf32, #tpu.memory_space<vmem>>, vector<1x8x48xf32>
      %37 = vector.shape_cast %36 : vector<1x8x48xf32> to vector<8x48xf32>
      %38 = vector.shape_cast %34 : vector<8x48xf32> to vector<1x8x48xf32>
      tpu.vector_store %arg8[%35, %c0_26, %c0_27], %38 {strides = array<i32>} : memref<2x8x48xf32, #tpu.memory_space<vmem>>, vector<1x8x48xf32>,
      %39 = vector.broadcast %0 : vector<1x48xf32> to vector<8x48xf32>
      %40 = arith.mulf %34, %39 : vector<8x48xf32>
      %cst_28 = arith.constant dense<0.000000e+00> : vector<8xf32>
      %41 = vector.multi_reduction <add>, %40, %cst_28 [1] : vector<8x48xf32> to vector<8xf32>
      %42 = vector.shape_cast %41 : vector<8xf32> to vector<8x1xf32>
      %43 = arith.addf %arg11, %42 : vector<8x1xf32>
      %44 = arith.mulf %40, %34 : vector<8x48xf32>
      %cst_29 = arith.constant dense<0.000000e+00> : vector<8xf32>
      %45 = vector.multi_reduction <add>, %44, %cst_29 [1] : vector<8x48xf32> to vector<8xf32>
      %46 = vector.shape_cast %45 : vector<8xf32> to vector<8x1xf32>
      %47 = arith.addf %arg12, %46 : vector<8x1xf32>
      scf.yield %43, %47 : vector<8x1xf32>, vector<8x1xf32>
    }
    %c2_i32_1 = arith.constant 2 : i32
    %cst_2 = arith.constant 0.013888889 : f32
    %4 = vector.broadcast %cst_2 : f32 to vector<8x1xf32>
    %5 = arith.mulf %3#0, %4 : vector<8x1xf32>
    %cst_3 = arith.constant 0.013888889 : f32
    %6 = vector.broadcast %cst_3 : f32 to vector<8x1xf32>
    %7 = arith.mulf %3#1, %6 : vector<8x1xf32>
    %8 = arith.mulf %5, %5 : vector<8x1xf32>
    %9 = arith.subf %7, %8 : vector<8x1xf32>
    %cst_4 = arith.constant 0.000000e+00 : f32
    %10 = vector.broadcast %cst_4 : f32 to vector<8x1xf32>
    %11 = arith.maximumf %9, %10 : vector<8x1xf32>
    %c0_5 = arith.constant 0 : index
    %c0_6 = arith.constant 0 : index
    %12 = vector.load %arg5[%c0_5, %c0_6] : memref<8x1xf32, #tpu.memory_space<vmem>>, vector<8x1xf32>
    %cst_7 = arith.constant 9.99999974E-6 : f32
    %13 = vector.broadcast %cst_7 : f32 to vector<8x1xf32>
    %14 = arith.addf %11, %13 : vector<8x1xf32>
    %15 = math.rsqrt %14 : vector<8x1xf32>
    %16 = arith.mulf %12, %15 : vector<8x1xf32>
    %c0_8 = arith.constant 0 : index
    %c0_9 = arith.constant 0 : index
    %17 = vector.load %arg6[%c0_8, %c0_9] : memref<8x1xf32, #tpu.memory_space<vmem>>, vector<8x1xf32>
    %18 = arith.mulf %5, %16 : vector<8x1xf32>
    %19 = arith.subf %17, %18 : vector<8x1xf32>
    %c0_i32_10 = arith.constant 0 : i32
    %c2_i32_11 = arith.constant 2 : i32
    %20 = arith.addi %c0_i32_10, %c2_i32_11 : i32
    %c1_i32_12 = arith.constant 1 : i32
    scf.for %arg10 = %c0_i32_10 to %20 step %c1_i32_12  : i32 {
      %21 = arith.index_cast %arg10 : i32 to index
      %c0_14 = arith.constant 0 : index
      %c0_15 = arith.constant 0 : index
      %22 = vector.load %arg8[%21, %c0_14, %c0_15] : memref<2x8x48xf32, #tpu.memory_space<vmem>>, vector<1x8x48xf32>
      %23 = vector.shape_cast %22 : vector<1x8x48xf32> to vector<8x48xf32>
      %24 = vector.broadcast %16 : vector<8x1xf32> to vector<8x48xf32>
      %25 = arith.mulf %23, %24 : vector<8x48xf32>
      %26 = vector.broadcast %19 : vector<8x1xf32> to vector<8x48xf32>
      %27 = arith.addf %25, %26 : vector<8x48xf32>
      %28 = vector.extract_strided_slice %27 {offsets = [0, 0], sizes = [8, 39], strides = [1, 1]} : vector<8x48xf32> to vector<8x39xf32>
      %29 = vector.extract_strided_slice %27 {offsets = [0, 1], sizes = [8, 39], strides = [1, 1]} : vector<8x48xf32> to vector<8x39xf32>
      %30 = arith.maximumf %28, %29 : vector<8x39xf32>
      %31 = vector.extract_strided_slice %27 {offsets = [0, 8], sizes = [8, 39], strides = [1, 1]} : vector<8x48xf32> to vector<8x39xf32>
      %32 = arith.maximumf %30, %31 : vector<8x39xf32>
      %33 = vector.extract_strided_slice %27 {offsets = [0, 9], sizes = [8, 39], strides = [1, 1]} : vector<8x48xf32> to vector<8x39xf32>
      %34 = arith.maximumf %32, %33 : vector<8x39xf32>
      %c0_16 = arith.constant 0 : index
      %c0_17 = arith.constant 0 : index
      %35 = vector.load %arg4[%c0_16, %c0_17] : memref<39x9xf32, #tpu.memory_space<vmem>>, vector<39x9xf32>
      %cst_18 = arith.constant dense<0.000000e+00> : vector<8x9xf32>
      %36 = tpu.matmul %34, %35, %cst_18 {dimension_numbers = #tpu.dot_dimension_numbers<[1], [0], [0], [1], [0, 0, 1, 1], [], []>} : vector<8x39xf32>, vector<39x9xf32>, vector<8x9xf32> -> vector<8x9xf32>
      %cst_19 = arith.constant 0.000000e+00 : f32
      %37 = vector.broadcast %cst_19 : f32 to vector<8x9xf32>
      %38 = arith.cmpf oge, %36, %37 : vector<8x9xf32>
      %cst_20 = arith.constant 3.000000e-01 : f32
      %39 = vector.broadcast %cst_20 : f32 to vector<8x9xf32>
      %40 = arith.mulf %39, %36 : vector<8x9xf32>
      %41 = arith.select %38, %36, %40 : vector<8x9xi1>, vector<8x9xf32>
      %42 = arith.truncf %41 : vector<8x9xf32> to vector<8x9xbf16>
      %43 = arith.index_cast %arg10 : i32 to index
      %c0_21 = arith.constant 0 : index
      %c0_22 = arith.constant 0 : index
      %44 = vector.load %arg7[%43, %c0_21, %c0_22] : memref<2x8x9xbf16, #tpu.memory_space<vmem>>, vector<1x8x9xbf16>
      %45 = vector.shape_cast %44 : vector<1x8x9xbf16> to vector<8x9xbf16>
      %46 = vector.shape_cast %42 : vector<8x9xbf16> to vector<1x8x9xbf16>
      tpu.vector_store %arg7[%43, %c0_21, %c0_22], %46 {strides = array<i32>} : memref<2x8x9xbf16, #tpu.memory_space<vmem>>, vector<1x8x9xbf16>,
    }
    %c2_i32_13 = arith.constant 2 : i32
    return
  }
  func.func @transform_0(%arg0: i32) -> (i32, i32, i32) {
    %c0_i32 = arith.constant 0 : i32
    %c0_i32_0 = arith.constant 0 : i32
    %c0_i32_1 = arith.constant 0 : i32
    %c0_i32_2 = arith.constant 0 : i32
    return %c0_i32, %c0_i32_0, %c0_i32_1 : i32, i32, i32
  }
  func.func @transform_1(%arg0: i32) -> (i32, i32) {
    %c0_i32 = arith.constant 0 : i32
    %c0_i32_0 = arith.constant 0 : i32
    %c0_i32_1 = arith.constant 0 : i32
    return %c0_i32, %c0_i32_0 : i32, i32
  }
  func.func @transform_2(%arg0: i32) -> (i32, i32) {
    %c0_i32 = arith.constant 0 : i32
    %c0_i32_0 = arith.constant 0 : i32
    %c0_i32_1 = arith.constant 0 : i32
    return %c0_i32, %c0_i32_0 : i32, i32
  }
  func.func @transform_3(%arg0: i32) -> (i32, i32) {
    %c0_i32 = arith.constant 0 : i32
    %c0_i32_0 = arith.constant 0 : i32
    %c0_i32_1 = arith.constant 0 : i32
    return %c0_i32, %c0_i32_0 : i32, i32
  }
  func.func @transform_4(%arg0: i32) -> (i32, i32) {
    %c0_i32 = arith.constant 0 : i32
    %c0_i32_0 = arith.constant 0 : i32
    %c0_i32_1 = arith.constant 0 : i32
    return %c0_i32, %c0_i32_0 : i32, i32
  }
  func.func @transform_5(%arg0: i32) -> (i32, i32) {
    %c0_i32 = arith.constant 0 : i32
    %c0_i32_0 = arith.constant 0 : i32
    %c0_i32_1 = arith.constant 0 : i32
    return %c0_i32, %c0_i32_0 : i32, i32
  }
  func.func @transform_6(%arg0: i32) -> (i32, i32, i32) {
    %c0_i32 = arith.constant 0 : i32
    %c0_i32_0 = arith.constant 0 : i32
    %c0_i32_1 = arith.constant 0 : i32
    %c0_i32_2 = arith.constant 0 : i32
    return %c0_i32, %c0_i32_0, %c0_i32_1 : i32, i32, i32
  }
}

module attributes {stable_mosaic.version = 11 : i64} {
  func.func @kernel(%arg0: i32, %arg1: memref<2x8x32xbf16, #tpu.memory_space<vmem>>, %arg2: memref<16x32xbf16, #tpu.memory_space<vmem>>, %arg3: memref<1x16xf32, #tpu.memory_space<vmem>>, %arg4: memref<16x4xf32, #tpu.memory_space<vmem>>, %arg5: memref<16x1xf32, #tpu.memory_space<vmem>>, %arg6: memref<16x1xf32, #tpu.memory_space<vmem>>, %arg7: memref<2x16x4xf32, #tpu.memory_space<vmem>>, %arg8: memref<2x16x16xf32, #tpu.memory_space<vmem>>, %arg9: memref<32x16xbf16, #tpu.memory_space<vmem>>) attributes {dimension_semantics = [#tpu.dimension_semantics<arbitrary>], iteration_bounds = array<i64: 1>, scalar_prefetch = 0 : i64, scratch_operands = 2 : i64, tpu.core_type = #tpu.core_type<tc>, window_params = [{pipeline_mode = #tpu.pipeline_mode<synchronous>, transform_indices = @transform_0, window_bounds = array<i64: 2, 8, 32>}, {pipeline_mode = #tpu.pipeline_mode<synchronous>, transform_indices = @transform_1, window_bounds = array<i64: 16, 32>}, {pipeline_mode = #tpu.pipeline_mode<synchronous>, transform_indices = @transform_2, window_bounds = array<i64: 1, 16>}, {pipeline_mode = #tpu.pipeline_mode<synchronous>, transform_indices = @transform_3, window_bounds = array<i64: 16, 4>}, {pipeline_mode = #tpu.pipeline_mode<synchronous>, transform_indices = @transform_4, window_bounds = array<i64: 16, 1>}, {pipeline_mode = #tpu.pipeline_mode<synchronous>, transform_indices = @transform_5, window_bounds = array<i64: 16, 1>}, {pipeline_mode = #tpu.pipeline_mode<synchronous>, transform_indices = @transform_6, window_bounds = array<i64: 2, 16, 4>}]} {
    %c0 = arith.constant 0 : index
    %c0_0 = arith.constant 0 : index
    %0 = vector.load %arg3[%c0, %c0_0] : memref<1x16xf32, #tpu.memory_space<vmem>>, vector<1x16xf32>
    %cst = arith.constant 0.000000e+00 : f32
    %1 = vector.broadcast %cst : f32 to vector<16x1xf32>
    %c0_i32 = arith.constant 0 : i32
    %c2_i32 = arith.constant 2 : i32
    %2 = arith.addi %c0_i32, %c2_i32 : i32
    %c1_i32 = arith.constant 1 : i32
    %3:2 = scf.for %arg10 = %c0_i32 to %2 step %c1_i32 iter_args(%arg11 = %1, %arg12 = %1) -> (vector<16x1xf32>, vector<16x1xf32>)  : i32 {
      %21 = arith.index_cast %arg10 : i32 to index
      %c0_14 = arith.constant 0 : index
      %c0_15 = arith.constant 0 : index
      %22 = vector.load %arg1[%21, %c0_14, %c0_15] : memref<2x8x32xbf16, #tpu.memory_space<vmem>>, vector<1x8x32xbf16>
      %23 = vector.shape_cast %22 : vector<1x8x32xbf16> to vector<8x32xbf16>
      %24 = vector.extract_strided_slice %23 {offsets = [0, 0], sizes = [8, 16], strides = [1, 1]} : vector<8x32xbf16> to vector<8x16xbf16>
      %c0_16 = arith.constant 0 : index
      %c0_17 = arith.constant 0 : index
      %25 = vector.load %arg9[%c0_16, %c0_17] : memref<32x16xbf16, #tpu.memory_space<vmem>>, vector<8x16xbf16>
      tpu.vector_store %arg9[%c0_16, %c0_17], %24 {strides = array<i32>} : memref<32x16xbf16, #tpu.memory_space<vmem>>, vector<8x16xbf16>,
      %26 = vector.extract_strided_slice %23 {offsets = [0, 1], sizes = [8, 16], strides = [1, 1]} : vector<8x32xbf16> to vector<8x16xbf16>
      %c8 = arith.constant 8 : index
      %c0_18 = arith.constant 0 : index
      %27 = vector.load %arg9[%c8, %c0_18] : memref<32x16xbf16, #tpu.memory_space<vmem>>, vector<8x16xbf16>
      tpu.vector_store %arg9[%c8, %c0_18], %26 {strides = array<i32>} : memref<32x16xbf16, #tpu.memory_space<vmem>>, vector<8x16xbf16>,
      %28 = vector.extract_strided_slice %23 {offsets = [0, 8], sizes = [8, 16], strides = [1, 1]} : vector<8x32xbf16> to vector<8x16xbf16>
      %c16 = arith.constant 16 : index
      %c0_19 = arith.constant 0 : index
      %29 = vector.load %arg9[%c16, %c0_19] : memref<32x16xbf16, #tpu.memory_space<vmem>>, vector<8x16xbf16>
      tpu.vector_store %arg9[%c16, %c0_19], %28 {strides = array<i32>} : memref<32x16xbf16, #tpu.memory_space<vmem>>, vector<8x16xbf16>,
      %30 = vector.extract_strided_slice %23 {offsets = [0, 9], sizes = [8, 16], strides = [1, 1]} : vector<8x32xbf16> to vector<8x16xbf16>
      %c24 = arith.constant 24 : index
      %c0_20 = arith.constant 0 : index
      %31 = vector.load %arg9[%c24, %c0_20] : memref<32x16xbf16, #tpu.memory_space<vmem>>, vector<8x16xbf16>
      tpu.vector_store %arg9[%c24, %c0_20], %30 {strides = array<i32>} : memref<32x16xbf16, #tpu.memory_space<vmem>>, vector<8x16xbf16>,
      %c0_21 = arith.constant 0 : index
      %c0_22 = arith.constant 0 : index
      %32 = vector.load %arg2[%c0_21, %c0_22] : memref<16x32xbf16, #tpu.memory_space<vmem>>, vector<16x32xbf16>
      %c0_23 = arith.constant 0 : index
      %c0_24 = arith.constant 0 : index
      %33 = vector.load %arg9[%c0_23, %c0_24] : memref<32x16xbf16, #tpu.memory_space<vmem>>, vector<32x16xbf16>
      %cst_25 = arith.constant dense<0.000000e+00> : vector<16x16xf32>
      %34 = tpu.matmul %32, %33, %cst_25 {dimension_numbers = #tpu.dot_dimension_numbers<[1], [0], [0], [1], [0, 0, 1, 1], [], []>} : vector<16x32xbf16>, vector<32x16xbf16>, vector<16x16xf32> -> vector<16x16xf32>
      %35 = arith.index_cast %arg10 : i32 to index
      %c0_26 = arith.constant 0 : index
      %c0_27 = arith.constant 0 : index
      %36 = vector.load %arg8[%35, %c0_26, %c0_27] : memref<2x16x16xf32, #tpu.memory_space<vmem>>, vector<1x16x16xf32>
      %37 = vector.shape_cast %36 : vector<1x16x16xf32> to vector<16x16xf32>
      %38 = vector.shape_cast %34 : vector<16x16xf32> to vector<1x16x16xf32>
      tpu.vector_store %arg8[%35, %c0_26, %c0_27], %38 {strides = array<i32>} : memref<2x16x16xf32, #tpu.memory_space<vmem>>, vector<1x16x16xf32>,
      %39 = vector.broadcast %0 : vector<1x16xf32> to vector<16x16xf32>
      %40 = arith.mulf %34, %39 : vector<16x16xf32>
      %cst_28 = arith.constant dense<0.000000e+00> : vector<16xf32>
      %41 = vector.multi_reduction <add>, %40, %cst_28 [1] : vector<16x16xf32> to vector<16xf32>
      %42 = vector.shape_cast %41 : vector<16xf32> to vector<16x1xf32>
      %43 = arith.addf %arg11, %42 : vector<16x1xf32>
      %44 = arith.mulf %40, %34 : vector<16x16xf32>
      %cst_29 = arith.constant dense<0.000000e+00> : vector<16xf32>
      %45 = vector.multi_reduction <add>, %44, %cst_29 [1] : vector<16x16xf32> to vector<16xf32>
      %46 = vector.shape_cast %45 : vector<16xf32> to vector<16x1xf32>
      %47 = arith.addf %arg12, %46 : vector<16x1xf32>
      scf.yield %43, %47 : vector<16x1xf32>, vector<16x1xf32>
    }
    %c2_i32_1 = arith.constant 2 : i32
    %cst_2 = arith.constant 1.250000e-01 : f32
    %4 = vector.broadcast %cst_2 : f32 to vector<16x1xf32>
    %5 = arith.mulf %3#0, %4 : vector<16x1xf32>
    %cst_3 = arith.constant 1.250000e-01 : f32
    %6 = vector.broadcast %cst_3 : f32 to vector<16x1xf32>
    %7 = arith.mulf %3#1, %6 : vector<16x1xf32>
    %8 = arith.mulf %5, %5 : vector<16x1xf32>
    %9 = arith.subf %7, %8 : vector<16x1xf32>
    %cst_4 = arith.constant 0.000000e+00 : f32
    %10 = vector.broadcast %cst_4 : f32 to vector<16x1xf32>
    %11 = arith.maximumf %9, %10 : vector<16x1xf32>
    %c0_5 = arith.constant 0 : index
    %c0_6 = arith.constant 0 : index
    %12 = vector.load %arg5[%c0_5, %c0_6] : memref<16x1xf32, #tpu.memory_space<vmem>>, vector<16x1xf32>
    %cst_7 = arith.constant 9.99999974E-6 : f32
    %13 = vector.broadcast %cst_7 : f32 to vector<16x1xf32>
    %14 = arith.addf %11, %13 : vector<16x1xf32>
    %15 = math.rsqrt %14 : vector<16x1xf32>
    %16 = arith.mulf %12, %15 : vector<16x1xf32>
    %c0_8 = arith.constant 0 : index
    %c0_9 = arith.constant 0 : index
    %17 = vector.load %arg6[%c0_8, %c0_9] : memref<16x1xf32, #tpu.memory_space<vmem>>, vector<16x1xf32>
    %18 = arith.mulf %5, %16 : vector<16x1xf32>
    %19 = arith.subf %17, %18 : vector<16x1xf32>
    %c0_i32_10 = arith.constant 0 : i32
    %c2_i32_11 = arith.constant 2 : i32
    %20 = arith.addi %c0_i32_10, %c2_i32_11 : i32
    %c1_i32_12 = arith.constant 1 : i32
    scf.for %arg10 = %c0_i32_10 to %20 step %c1_i32_12  : i32 {
      %21 = arith.index_cast %arg10 : i32 to index
      %c0_14 = arith.constant 0 : index
      %c0_15 = arith.constant 0 : index
      %22 = vector.load %arg8[%21, %c0_14, %c0_15] : memref<2x16x16xf32, #tpu.memory_space<vmem>>, vector<1x16x16xf32>
      %23 = vector.shape_cast %22 : vector<1x16x16xf32> to vector<16x16xf32>
      %24 = vector.broadcast %16 : vector<16x1xf32> to vector<16x16xf32>
      %25 = arith.mulf %23, %24 : vector<16x16xf32>
      %26 = vector.broadcast %19 : vector<16x1xf32> to vector<16x16xf32>
      %27 = arith.addf %25, %26 : vector<16x16xf32>
      %c0_16 = arith.constant 0 : index
      %c0_17 = arith.constant 0 : index
      %28 = vector.load %arg4[%c0_16, %c0_17] : memref<16x4xf32, #tpu.memory_space<vmem>>, vector<16x4xf32>
      %cst_18 = arith.constant dense<0.000000e+00> : vector<16x4xf32>
      %29 = tpu.matmul %27, %28, %cst_18 {dimension_numbers = #tpu.dot_dimension_numbers<[1], [0], [0], [1], [0, 0, 1, 1], [], []>} : vector<16x16xf32>, vector<16x4xf32>, vector<16x4xf32> -> vector<16x4xf32>
      %cst_19 = arith.constant 0.000000e+00 : f32
      %30 = vector.broadcast %cst_19 : f32 to vector<16x4xf32>
      %31 = arith.cmpf oge, %29, %30 : vector<16x4xf32>
      %cst_20 = arith.constant 3.000000e-01 : f32
      %32 = vector.broadcast %cst_20 : f32 to vector<16x4xf32>
      %33 = arith.mulf %32, %29 : vector<16x4xf32>
      %34 = arith.select %31, %29, %33 : vector<16x4xi1>, vector<16x4xf32>
      %35 = arith.index_cast %arg10 : i32 to index
      %c0_21 = arith.constant 0 : index
      %c0_22 = arith.constant 0 : index
      %36 = vector.load %arg7[%35, %c0_21, %c0_22] : memref<2x16x4xf32, #tpu.memory_space<vmem>>, vector<1x16x4xf32>
      %37 = vector.shape_cast %36 : vector<1x16x4xf32> to vector<16x4xf32>
      %38 = vector.shape_cast %34 : vector<16x4xf32> to vector<1x16x4xf32>
      tpu.vector_store %arg7[%35, %c0_21, %c0_22], %38 {strides = array<i32>} : memref<2x16x4xf32, #tpu.memory_space<vmem>>, vector<1x16x4xf32>,
    }
    %c2_i32_13 = arith.constant 2 : i32
    return
  }
  func.func @transform_0(%arg0: i32) -> (i32, i32, i32) {
    %c0_i32 = arith.constant 0 : i32
    %c0_i32_0 = arith.constant 0 : i32
    %c0_i32_1 = arith.constant 0 : i32
    %c0_i32_2 = arith.constant 0 : i32
    return %c0_i32, %c0_i32_0, %c0_i32_1 : i32, i32, i32
  }
  func.func @transform_1(%arg0: i32) -> (i32, i32) {
    %c0_i32 = arith.constant 0 : i32
    %c0_i32_0 = arith.constant 0 : i32
    %c0_i32_1 = arith.constant 0 : i32
    return %c0_i32, %c0_i32_0 : i32, i32
  }
  func.func @transform_2(%arg0: i32) -> (i32, i32) {
    %c0_i32 = arith.constant 0 : i32
    %c0_i32_0 = arith.constant 0 : i32
    %c0_i32_1 = arith.constant 0 : i32
    return %c0_i32, %c0_i32_0 : i32, i32
  }
  func.func @transform_3(%arg0: i32) -> (i32, i32) {
    %c0_i32 = arith.constant 0 : i32
    %c0_i32_0 = arith.constant 0 : i32
    %c0_i32_1 = arith.constant 0 : i32
    return %c0_i32, %c0_i32_0 : i32, i32
  }
  func.func @transform_4(%arg0: i32) -> (i32, i32) {
    %c0_i32 = arith.constant 0 : i32
    %c0_i32_0 = arith.constant 0 : i32
    %c0_i32_1 = arith.constant 0 : i32
    return %c0_i32, %c0_i32_0 : i32, i32
  }
  func.func @transform_5(%arg0: i32) -> (i32, i32) {
    %c0_i32 = arith.constant 0 : i32
    %c0_i32_0 = arith.constant 0 : i32
    %c0_i32_1 = arith.constant 0 : i32
    return %c0_i32, %c0_i32_0 : i32, i32
  }
  func.func @transform_6(%arg0: i32) -> (i32, i32, i32) {
    %c0_i32 = arith.constant 0 : i32
    %c0_i32_0 = arith.constant 0 : i32
    %c0_i32_1 = arith.constant 0 : i32
    %c0_i32_2 = arith.constant 0 : i32
    return %c0_i32, %c0_i32_0, %c0_i32_1 : i32, i32, i32
  }
}

</mosaic_0001>

<llo_original>
// kernel: a_call__.4
$region0: #{a_call__.4}
  #allocation0 [shape = 'u32[]', space=smem, size = 0x4, offset = 0x4, fixed_abs, tag = 'smem constant byte address 0x4 - core index']
  #allocation1 [shape = 'u32[144,128]{1,0:T(1,128)}', space=vmem, size = 0x12000, scoped, tag = 'internal scratch']
  #allocation2 [shape = 'f32[2,8,48]{2,1,0:T(8,128)}', space=vmem, size = 0x2000, scoped, tag = 'scratch operand']
  #allocation3 [shape = 'bf16[64,48]{1,0:T(16,128)(2,1)}', space=vmem, size = 0x4000, scoped, tag = 'scratch operand']
  %s0 = inlined_call_operand.vmem [shape: bf16[2,16,64], index: 0, kind: input, shape index: {}]
  %s1 = inlined_call_operand.vmem [shape: bf16[8,64], index: 1, kind: input, shape index: {}]
  %s2 = inlined_call_operand.vmem [shape: f32[1,48], index: 2, kind: input, shape index: {}]
  %s3 = inlined_call_operand.vmem [shape: f32[39,9], index: 3, kind: input, shape index: {}]
  %s4 = inlined_call_operand.vmem [shape: f32[8,1], index: 4, kind: input, shape index: {}]
  %s5 = inlined_call_operand.vmem [shape: f32[8,1], index: 5, kind: input, shape index: {}]
  %s6 = inlined_call_operand.vmem [shape: bf16[2,8,9], index: 6, kind: output, shape index: {}]
  %s7 = sld [smem:[#allocation0]]
  $region48: #{a_call__.4} parent=0
    _
  %s9 = ssub.s32 1, %s7
  %s10 = scalar_select 0, %s9, %s7
  // Predicated region
  $region2: #{a_call__.4} parent=0 // pred_check
    _
  $region3: #{a_call__.4} parent=0 // pred_check_branch
    %12 = sbr.rel (0) target = $region5
  $region4: #{a_call__.4} parent=0 // pred_region
    _
  $region5: #{a_call__.4} parent=0 // pred_fallthru
    _
  // Predicated region
  $region6: #{a_call__.4} parent=0 // pred_check
    _
  $region7: #{a_call__.4} parent=0 // pred_check_branch
    %14 = sbr.rel (0) target = $region9
  $region8: #{a_call__.4} parent=0 // pred_region
    _
  $region9: #{a_call__.4} parent=0 // pred_fallthru
    _
  // Predicated region
  $region10: #{a_call__.4} parent=0 // pred_check
    _
  $region11: #{a_call__.4} parent=0 // pred_check_branch
    %16 = sbr.rel (0) target = $region13
  $region12: #{a_call__.4} parent=0 // pred_region
    _
  $region13: #{a_call__.4} parent=0 // pred_fallthru
    _
  // Predicated region
  $region14: #{a_call__.4} parent=0 // pred_check
    _
  $region15: #{a_call__.4} parent=0 // pred_check_branch
    %18 = sbr.rel (0) target = $region17
  $region16: #{a_call__.4} parent=0 // pred_region
    _
  $region17: #{a_call__.4} parent=0 // pred_fallthru
    _
  // Predicated region
  $region18: #{a_call__.4} parent=0 // pred_check
    _
  $region19: #{a_call__.4} parent=0 // pred_check_branch
    %20 = sbr.rel (0) target = $region21
  $region20: #{a_call__.4} parent=0 // pred_region
    _
  $region21: #{a_call__.4} parent=0 // pred_fallthru
    _
  // Predicated region
  $region22: #{a_call__.4} parent=0 // pred_check
    _
  $region23: #{a_call__.4} parent=0 // pred_check_branch
    %22 = sbr.rel (0) target = $region25
  $region24: #{a_call__.4} parent=0 // pred_region
    _
  $region25: #{a_call__.4} parent=0 // pred_fallthru
    _
  %v24 = vld [vmem:[%s2] sm:$0x1]
  loop: start=0, step=1, limit=2
  $region26: #{a_call__.4} parent=0 // loop_pre_header
    _
  $region27: #{a_call__.4} parent=0 // loop_header
    %s26 = sphi 0, %s30
    %p27 = scmp.ge.s32.totalorder %s26, 2
    %v31 = vphi 0.0, %v120
    %v32 = vphi 0.0, %v125
  $region28: #{a_call__.4} parent=0 // loop_header_branch
    %29 = sbr.rel (%p27) target = $region32
  $region29: #{a_call__.4} parent=0 // loop_body
    %s33 = smul.u32 %s26, 2
    %s34 = smul.addr %s33, 4
    %s35 = scalar_lea.vmem %s0, %s34
    %v36 = vld [vmem:[%s35] sm:$0xf]
    %v37 = vld [vmem:[%s35 + $0x4] sm:$0xf]
    %v40 = vunpack.c.l.b16 %v36
    %v41 = vunpack.c.l.b16 %v37
    %v42 = vpack.c.b16 %v41, %v40
    %vm44 = vcmask 392192
    %45 = vst.msk [vmem:[#allocation3] sm:$0xff] %vm44, %v42
    %46 = vrot.lane.b32.xlu0 %v42, 127
    %v47 = vpop.permute.xlu0 %46
    %49 = vst.msk [vmem:[#allocation3 + $0x8] sm:$0xff] %vm44, %v47
    %50 = vrot.lane.b32.xlu0 %v42, 120
    %v51 = vpop.permute.xlu0 %50
    %53 = vst.msk [vmem:[#allocation3 + $0x10] sm:$0xff] %vm44, %v51
    %54 = vrot.lane.b32.xlu0 %v42, 119
    %v55 = vpop.permute.xlu0 %54
    %57 = vst.msk [vmem:[#allocation3 + $0x18] sm:$0xff] %vm44, %v55
    %v58 = vld [vmem:[%s1] sm:$0xf]
    %v59 = vld [vmem:[#allocation3] sm:$0xff]
    %v60 = vld [vmem:[#allocation3 + $0x8] sm:$0xff]
    %v61 = vld [vmem:[#allocation3 + $0x10] sm:$0xff]
    %v62 = vld [vmem:[#allocation3 + $0x18] sm:$0xff]
    %vm63 = vcmask 523264
    %v65 = vsel %vm63, %v58, 0
    %67 = vmatprep.subr.bf16.mxu0 0
    %68 = vmatpush1.bf16.msra.mxu0 %v59
    %69 = vmatprep.subr.bf16.mxu0 0
    %70 = vmatpush1.bf16.msra.mxu0 %v60
    %71 = vmatprep.subr.bf16.mxu0 0
    %72 = vmatpush1.bf16.msra.mxu0 %v61
    %73 = vmatprep.subr.bf16.mxu0 0
    %74 = vmatpush1.bf16.msra.mxu0 %v62
    %75 = vmatprep.subr.bf16.mxu0 0
    %76 = vmatpush1.bf16.msra.mxu0 0
    %77 = vmatprep.subr.bf16.mxu0 0
    %78 = vmatpush1.bf16.msra.mxu0 0
    %79 = vmatprep.subr.bf16.mxu0 0
    %80 = vmatpush1.bf16.msra.mxu0 0
    %81 = vmatprep.subr.bf16.mxu0 0
    %82 = vmatpush1.bf16.msra.mxu0 0
    %83 = vmatprep.subr.bf16.mxu0 0
    %84 = vmatpush1.bf16.msra.mxu0 0
    %85 = vmatprep.subr.bf16.mxu0 0
    %86 = vmatpush1.bf16.msra.mxu0 0
    %87 = vmatprep.subr.bf16.mxu0 0
    %88 = vmatpush1.bf16.msra.mxu0 0
    %89 = vmatprep.subr.bf16.mxu0 0
    %90 = vmatpush1.bf16.msra.mxu0 0
    %91 = vmatprep.subr.bf16.mxu0 0
    %92 = vmatpush1.bf16.msra.mxu0 0
    %93 = vmatprep.subr.bf16.mxu0 0
    %94 = vmatpush1.bf16.msra.mxu0 0
    %95 = vmatprep.subr.bf16.mxu0 0
    %96 = vmatpush1.bf16.msra.mxu0 0
    %97 = vmatprep.subr.bf16.mxu0 0
    %98 = vmatpush1.bf16.msra.mxu0 0
    %99 = vmatprep.mubr.bf16.mxu0 0
    %100 = vmatmul.mubr.bf16.gmra.mrb[0].mxu0 %v65
    %v101 = vpop.f32.mrb[0].mxu0
    %v102 = vadd.f32 0.0, %v101
    %v103 = vpop.f32.mrb[0].mxu0
    %v104 = vpop.f32.mrb[0].mxu0
    %v105 = vpop.f32.mrb[0].mxu0
    %106 = vdwg.mxu0
    %s107 = smul.u32 %s26, 8
    %s108 = scalar_lea.vmem [#allocation2], %s107
    %109 = vst.msk [vmem:[%s108] sm:$0xff] %vm44, %v102
    %v111 = vlaneseq
    %v112 = vshrl.u32 %v111, 7
    %v113 = vsub.s32 0, %v112
    %v114 = vrot.slane %v24, %v113
    %v116 = vmul.f32 %v102, %v114
    %v117 = vsel %vm44, %v116, 0.0
    %118 = vadd.xlane.f32.xlu0 %v117
    %v119 = vpop.xlane.xlu0 %118
    %v120 = vadd.f32 %v31, %v119
    %v121 = vmul.f32 %v116, %v102
    %v122 = vsel %vm44, %v121, 0.0
    %123 = vadd.xlane.f32.xlu0 %v122
    %v124 = vpop.xlane.xlu0 %123
    %v125 = vadd.f32 %v32, %v124
  $region30: #{a_call__.4} parent=0 // loop_footer
    %s30 = sadd.s32 1, %s26
  $region31: #{a_call__.4} parent=0 // loop_footer_branch
    %25 = sbr.rel target = $region27
  $region32: #{a_call__.4} parent=0 // loop_exit
    _
  %v126 = vmul.f32 %v31, 0.013888889
  %v127 = vmul.f32 %v32, 0.013888889
  %v128 = vmul.f32 %v126, %v126
  %v129 = vsub.f32 %v127, %v128
  %v130 = vmax.f32 %v129, 0.0
  %v131 = vld [vmem:[%s4] sm:$0xff]
  %v132 = vadd.f32 %v130, 1e-05
  %v133 = vrsqrt.pop %v132
  %v134 = vmul.f32 %v131, %v133
  %v135 = vld [vmem:[%s5] sm:$0xff]
  %v136 = vmul.f32 %v126, %v134
  %v137 = vsub.f32 %v135, %v136
  loop: start=0, step=1, limit=2
  $region33: #{a_call__.4} parent=0 // loop_pre_header
    _
  $region34: #{a_call__.4} parent=0 // loop_header
    %s139 = sphi 0, %s143
    %p140 = scmp.ge.s32.totalorder %s139, 2
  $region35: #{a_call__.4} parent=0 // loop_header_branch
    %142 = sbr.rel (%p140) target = $region39
  $region36: #{a_call__.4} parent=0 // loop_body
    %s144 = smul.u32 %s139, 8
    %s145 = scalar_lea.vmem [#allocation2], %s144
    %v146 = vld [vmem:[%s145] sm:$0xff]
    %148 = vset.pattern.permute.xlu0 0
    %149 = vperm.xlu0 %148, %v134
    %v150 = vpop.permute.xlu0 %149
    %v152 = vmul.f32 %v146, %v150
    %154 = vset.pattern.permute.xlu0 0
    %155 = vperm.xlu0 %154, %v137
    %v156 = vpop.permute.xlu0 %155
    %v158 = vadd.f32 %v152, %v156
    %160 = vrot.lane.b32.xlu0 %v158, 127
    %v161 = vpop.permute.xlu0 %160
    %v163 = vmax.f32 %v158, %v161
    %164 = vrot.lane.b32.xlu0 %v158, 120
    %v165 = vpop.permute.xlu0 %164
    %v167 = vmax.f32 %v163, %v165
    %168 = vrot.lane.b32.xlu0 %v158, 119
    %v169 = vpop.permute.xlu0 %168
    %v171 = vmax.f32 %v167, %v169
    %v172 = vld [vmem:[%s3] sm:$0xff]
    %v173 = vld [vmem:[%s3 + $0x8] sm:$0xff]
    %v174 = vld [vmem:[%s3 + $0x10] sm:$0xff]
    %v175 = vld [vmem:[%s3 + $0x18] sm:$0xff]
    %v176 = vld [vmem:[%s3 + $0x20] sm:$0x7f]
    %vm177 = vcmask 318464
    %v179 = vsel %vm177, %v171, 0
    %vm181 = vcmask 1046528
    %v183 = vsel %vm181, %v176, 0
    %185 = vmatprep.subr.mxu0 0.0
    %186 = vmatpush1.msra.mxu0 %v172
    %187 = vmatprep.subr.mxu0 0.0
    %188 = vmatpush1.msra.mxu0 %v173
    %189 = vmatprep.subr.mxu0 0.0
    %190 = vmatpush1.msra.mxu0 %v174
    %191 = vmatprep.subr.mxu0 0.0
    %192 = vmatpush1.msra.mxu0 %v175
    %193 = vmatprep.subr.mxu0 0.0
    %194 = vmatpush1.msra.mxu0 %v183
    %195 = vmatprep.subr.mxu0 0.0
    %196 = vmatpush1.msra.mxu0 0.0
    %197 = vmatprep.subr.mxu0 0.0
    %198 = vmatpush1.msra.mxu0 0.0
    %199 = vmatprep.subr.mxu0 0.0
    %200 = vmatpush1.msra.mxu0 0.0
    %201 = vmatprep.subr.mxu0 0.0
    %202 = vmatpush1.msra.mxu0 0.0
    %203 = vmatprep.subr.mxu0 0.0
    %204 = vmatpush1.msra.mxu0 0.0
    %205 = vmatprep.subr.mxu0 0.0
    %206 = vmatpush1.msra.mxu0 0.0
    %207 = vmatprep.subr.mxu0 0.0
    %208 = vmatpush1.msra.mxu0 0.0
    %209 = vmatprep.subr.mxu0 0.0
    %210 = vmatpush1.msra.mxu0 0.0
    %211 = vmatprep.subr.mxu0 0.0
    %212 = vmatpush1.msra.mxu0 0.0
    %213 = vmatprep.subr.mxu0 0.0
    %214 = vmatpush1.msra.mxu0 0.0
    %215 = vmatprep.subr.mxu0 0.0
    %216 = vmatpush1.msra.mxu0 0.0
    %217 = vmatprep.subr.mxu0 0.0
    %218 = vmatpush1.msra.mxu0 0.0
    %219 = vmatprep.subr.mxu0 0.0
    %220 = vmatpush1.msra.mxu0 0.0
    %221 = vmatprep.subr.mxu0 0.0
    %222 = vmatpush1.msra.mxu0 0.0
    %223 = vmatprep.subr.mxu0 0.0
    %224 = vmatpush1.msra.mxu0 0.0
    %225 = vmatprep.subr.mxu0 0.0
    %226 = vmatpush1.msra.mxu0 0.0
    %227 = vmatprep.subr.mxu0 0.0
    %228 = vmatpush1.msra.mxu0 0.0
    %229 = vmatprep.subr.mxu0 0.0
    %230 = vmatpush1.msra.mxu0 0.0
    %231 = vmatprep.subr.mxu0 0.0
    %232 = vmatpush1.msra.mxu0 0.0
    %233 = vmatprep.subr.mxu0 0.0
    %234 = vmatpush1.msra.mxu0 0.0
    %235 = vmatprep.subr.mxu0 0.0
    %236 = vmatpush1.msra.mxu0 0.0
    %237 = vmatprep.subr.mxu0 0.0
    %238 = vmatpush1.msra.mxu0 0.0
    %239 = vmatprep.subr.mxu0 0.0
    %240 = vmatpush1.msra.mxu0 0.0
    %241 = vmatprep.subr.mxu0 0.0
    %242 = vmatpush1.msra.mxu0 0.0
    %243 = vmatprep.subr.mxu0 0.0
    %244 = vmatpush1.msra.mxu0 0.0
    %245 = vmatprep.subr.mxu0 0.0
    %246 = vmatpush1.msra.mxu0 0.0
    %247 = vmatprep.subr.mxu0 0.0
    %248 = vmatpush1.msra.mxu0 0.0
    %249 = vmatprep.mubr.f32.mxu0 0.0
    %250 = vmatmul.mubr.f32.gmra.mrb[0].mxu0 %v179
    %v251 = vpop.f32.mrb[0].mxu0
    %v252 = vadd.f32 0.0, %v251
    %v253 = vpop.f32.mrb[0].mxu0
    %254 = vdwg.mxu0
    %vm255 = vcmp.ge.f32.partialorder %v252, 0.0
    %v256 = vmul.f32 %v252, 0.3
    %v257 = vsel %vm255, %v252, %v256
    %v258 = vpack.c.bf16 %v257, %v257
    %s259 = smul.addr %s139, 4
    %s260 = scalar_lea.vmem %s6, %s259
    %vm261 = vcmask 68608
    %262 = vst.msk [vmem:[%s260] sm:$0xf] %vm261, %v258
  $region37: #{a_call__.4} parent=0 // loop_footer
    %s143 = sadd.s32 1, %s139
  $region38: #{a_call__.4} parent=0 // loop_footer_branch
    %138 = sbr.rel target = $region34
  $region39: #{a_call__.4} parent=0 // loop_exit
    _
  // Predicated region
  $region40: #{a_call__.4} parent=0 // pred_check
    _
  $region41: #{a_call__.4} parent=0 // pred_check_branch
    %264 = sbr.rel (0) target = $region43
  $region42: #{a_call__.4} parent=0 // pred_region
    _
  $region43: #{a_call__.4} parent=0 // pred_fallthru
    _
  // Predicated region
  $region44: #{a_call__.4} parent=0 // pred_check
    _
  $region45: #{a_call__.4} parent=0 // pred_check_branch
    %266 = sbr.rel (0) target = $region47
  $region46: #{a_call__.4} parent=0 // pred_region
    _
  $region47: #{a_call__.4} parent=0 // pred_fallthru
    _

// kernel: a_call__.3
$region0: #{a_call__.3}
  #allocation0 [shape = 'u32[]', space=smem, size = 0x4, offset = 0x4, fixed_abs, tag = 'smem constant byte address 0x4 - core index']
  #allocation1 [shape = 'u32[144,128]{1,0:T(1,128)}', space=vmem, size = 0x12000, scoped, tag = 'internal scratch']
  #allocation2 [shape = 'f32[2,4,832]{2,1,0:T(4,128)}', space=vmem, size = 0x7000, scoped, tag = 'scratch operand']
  #allocation3 [shape = 'bf16[9,832]{1,0:T(8,128)(2,1)}', space=vmem, size = 0x7000, scoped, tag = 'scratch operand']
  %s0 = inlined_call_operand.vmem [shape: bf16[2,1,928], index: 0, kind: input, shape index: {}]
  %s1 = inlined_call_operand.vmem [shape: bf16[4,9], index: 1, kind: input, shape index: {}]
  %s2 = inlined_call_operand.vmem [shape: f32[1,832], index: 2, kind: input, shape index: {}]
  %s3 = inlined_call_operand.vmem [shape: f32[799,169], index: 3, kind: input, shape index: {}]
  %s4 = inlined_call_operand.vmem [shape: f32[4,1], index: 4, kind: input, shape index: {}]
  %s5 = inlined_call_operand.vmem [shape: f32[4,1], index: 5, kind: input, shape index: {}]
  %s6 = inlined_call_operand.vmem [shape: bf16[2,4,169], index: 6, kind: output, shape index: {}]
  %s7 = sld [smem:[#allocation0]]
  $region48: #{a_call__.3} parent=0
    _
  %s9 = ssub.s32 1, %s7
  %s10 = scalar_select 0, %s9, %s7
  // Predicated region
  $region2: #{a_call__.3} parent=0 // pred_check
    _
  $region3: #{a_call__.3} parent=0 // pred_check_branch
    %12 = sbr.rel (0) target = $region5
  $region4: #{a_call__.3} parent=0 // pred_region
    _
  $region5: #{a_call__.3} parent=0 // pred_fallthru
    _
  // Predicated region
  $region6: #{a_call__.3} parent=0 // pred_check
    _
  $region7: #{a_call__.3} parent=0 // pred_check_branch
    %14 = sbr.rel (0) target = $region9
  $region8: #{a_call__.3} parent=0 // pred_region
    _
  $region9: #{a_call__.3} parent=0 // pred_fallthru
    _
  // Predicated region
  $region10: #{a_call__.3} parent=0 // pred_check
    _
  $region11: #{a_call__.3} parent=0 // pred_check_branch
    %16 = sbr.rel (0) target = $region13
  $region12: #{a_call__.3} parent=0 // pred_region
    _
  $region13: #{a_call__.3} parent=0 // pred_fallthru
    _
  // Predicated region
  $region14: #{a_call__.3} parent=0 // pred_check
    _
  $region15: #{a_call__.3} parent=0 // pred_check_branch
    %18 = sbr.rel (0) target = $region17
  $region16: #{a_call__.3} parent=0 // pred_region
    _
  $region17: #{a_call__.3} parent=0 // pred_fallthru
    _
  // Predicated region
  $region18: #{a_call__.3} parent=0 // pred_check
    _
  $region19: #{a_call__.3} parent=0 // pred_check_branch
    %20 = sbr.rel (0) target = $region21
  $region20: #{a_call__.3} parent=0 // pred_region
    _
  $region21: #{a_call__.3} parent=0 // pred_fallthru
    _
  // Predicated region
  $region22: #{a_call__.3} parent=0 // pred_check
    _
  $region23: #{a_call__.3} parent=0 // pred_check_branch
    %22 = sbr.rel (0) target = $region25
  $region24: #{a_call__.3} parent=0 // pred_region
    _
  $region25: #{a_call__.3} parent=0 // pred_fallthru
    _
  %v24 = vld [vmem:[%s2] sm:$0x7f]
  loop: start=0, step=1, limit=2
  $region26: #{a_call__.3} parent=0 // loop_pre_header
    _
  $region27: #{a_call__.3} parent=0 // loop_header
    %s26 = sphi 0, %s30
    %p27 = scmp.ge.s32.totalorder %s26, 2
    %v31 = vphi 0.0, %v820
    %v32 = vphi 0.0, %v843
  $region28: #{a_call__.3} parent=0 // loop_header_branch
    %29 = sbr.rel (%p27) target = $region32
  $region29: #{a_call__.3} parent=0 // loop_body
    %s33 = smul.u32 %s26, 8
    %s34 = scalar_lea.vmem %s0, %s33
    %v35 = vld [vmem:[%s34] sm:$0xff]
    %v37 = vcombine.high %v35, %v35
    %v39 = vunpack.c.l.s4 1935823168
    %v40 = vunpack.c.0.s8 %v39
    %v41 = vlaneseq
    %v42 = vshrl.u32 %v41, 7
    %v43 = vsub.s32 %v40, %v42
    %v44 = vrot.slane %v35, %v43
    %v46 = vunpack.c.l.s4 1935823168
    %v47 = vunpack.c.0.s8 %v46
    %v48 = vlaneseq
    %v49 = vshrl.u32 %v48, 7
    %v50 = vsub.s32 %v47, %v49
    %v51 = vrot.slane %v37, %v50
    %v52 = vcombine.high %v44, %v44
    %v53 = vcombine.high %v51, %v51
    %v55 = vunpack.c.l.s4 1935823168
    %v56 = vunpack.c.0.s8 %v55
    %v57 = vlaneseq
    %v58 = vshrl.u32 %v57, 7
    %v59 = vsub.s32 %v56, %v58
    %v60 = vrot.slane %v44, %v59
    %v62 = vunpack.c.l.s4 1935823168
    %v63 = vunpack.c.0.s8 %v62
    %v64 = vlaneseq
    %v65 = vshrl.u32 %v64, 7
    %v66 = vsub.s32 %v63, %v65
    %v67 = vrot.slane %v52, %v66
    %v69 = vunpack.c.l.s4 1935823168
    %v70 = vunpack.c.0.s8 %v69
    %v71 = vlaneseq
    %v72 = vshrl.u32 %v71, 7
    %v73 = vsub.s32 %v70, %v72
    %v74 = vrot.slane %v51, %v73
    %v76 = vunpack.c.l.s4 1935823168
    %v77 = vunpack.c.0.s8 %v76
    %v78 = vlaneseq
    %v79 = vshrl.u32 %v78, 7
    %v80 = vsub.s32 %v77, %v79
    %v81 = vrot.slane %v53, %v80
    %vm86 = vcmask 1040384
    %vm87 = vsmask.f32 256
    %vm88 = vmand %vm86, %vm87
    %vm89 = vcmask 1044484
    %vm90 = vsmask.f32 4352
    %vm91 = vmand %vm89, %vm90
    %vm92 = vmor %vm91, %vm88
    %v93 = vld [vmem:[#allocation3] sm:$0x11]
    %v94 = vsel %vm92, %v60, %v93
    %95 = vst [vmem:[#allocation3] sm:$0x11] %v94
    %v96 = vld [vmem:[#allocation3 + $0x8] sm:$0x11]
    %v97 = vsel %vm92, %v67, %v96
    %98 = vst [vmem:[#allocation3 + $0x8] sm:$0x11] %v97
    %v99 = vld [vmem:[#allocation3 + $0x10] sm:$0x11]
    %v100 = vsel %vm92, %v74, %v99
    %101 = vst [vmem:[#allocation3 + $0x10] sm:$0x11] %v100
    %vm102 = vcmask 516096
    %vm103 = vmand %vm102, %vm87
    %v104 = vld [vmem:[#allocation3 + $0x18] sm:$0x1]
    %v105 = vsel %vm103, %v81, %v104
    %106 = vst [vmem:[#allocation3 + $0x18] sm:$0x1] %v105
    %v108 = vshll.u32 %v60, 16
    %v111 = vshll.u32 %v67, 16
    %v114 = vshll.u32 %v74, 16
    %v117 = vshll.u32 %v81, 16
    %119 = vrot.lane.b32.xlu0 %v108, 127
    %v120 = vpop.permute.xlu0 %119
    %121 = vrot.lane.b32.xlu0 %v111, 127
    %v122 = vpop.permute.xlu0 %121
    %123 = vrot.lane.b32.xlu0 %v114, 127
    %v124 = vpop.permute.xlu0 %123
    %125 = vrot.lane.b32.xlu0 %v117, 127
    %v126 = vpop.permute.xlu0 %125
    %v127 = vrot.slane %v120, 4
    %v128 = vrot.slane %v122, 4
    %v129 = vrot.slane %v124, 4
    %v130 = vrot.slane %v126, 4
    %vm131 = vcmask 1043456
    %v132 = vsel %vm131, %v127, %v128
    %vm133 = vcmask 1039360
    %v134 = vsel %vm133, %v120, %v132
    %v135 = vsel %vm131, %v128, %v129
    %v136 = vsel %vm133, %v122, %v135
    %v137 = vsel %vm131, %v129, %v130
    %v138 = vsel %vm133, %v124, %v137
    %vm143 = vsmask.f32 7938
    %vm144 = vmand %vm86, %vm143
    %vm145 = vsmask.f32 7954
    %vm146 = vmand %vm89, %vm145
    %vm147 = vmor %vm146, %vm144
    %v148 = vld [vmem:[#allocation3] sm:$0x11]
    %v149 = vsel %vm147, %v134, %v148
    %150 = vst [vmem:[#allocation3] sm:$0x11] %v149
    %v151 = vld [vmem:[#allocation3 + $0x8] sm:$0x11]
    %v152 = vsel %vm147, %v136, %v151
    %153 = vst [vmem:[#allocation3 + $0x8] sm:$0x11] %v152
    %v154 = vld [vmem:[#allocation3 + $0x10] sm:$0x11]
    %v155 = vsel %vm147, %v138, %v154
    %156 = vst [vmem:[#allocation3 + $0x10] sm:$0x11] %v155
    %vm157 = vmand %vm102, %vm143
    %v158 = vld [vmem:[#allocation3 + $0x18] sm:$0x1]
    %v159 = vsel %vm157, %v126, %v158
    %160 = vst [vmem:[#allocation3 + $0x18] sm:$0x1] %v159
    %v161 = vcombine.low %v44, %v44
    %v162 = vcombine.low %v51, %v51
    %v164 = vunpack.c.l.s4 1935823168
    %v165 = vunpack.c.0.s8 %v164
    %v166 = vlaneseq
    %v167 = vshrl.u32 %v166, 7
    %v168 = vsub.s32 %v165, %v167
    %v169 = vrot.slane %v161, %v168
    %v171 = vunpack.c.l.s4 1935823168
    %v172 = vunpack.c.0.s8 %v171
    %v173 = vlaneseq
    %v174 = vshrl.u32 %v173, 7
    %v175 = vsub.s32 %v172, %v174
    %v176 = vrot.slane %v162, %v175
    %177 = vrot.lane.b32.xlu0 %v169, 126
    %v178 = vpop.permute.xlu0 %177
    %179 = vrot.lane.b32.xlu0 %v60, 126
    %v180 = vpop.permute.xlu0 %179
    %181 = vrot.lane.b32.xlu0 %v176, 126
    %v182 = vpop.permute.xlu0 %181
    %183 = vrot.lane.b32.xlu0 %v74, 126
    %v184 = vpop.permute.xlu0 %183
    %v185 = vrot.slane %v178, 4
    %v186 = vrot.slane %v180, 4
    %v187 = vrot.slane %v182, 4
    %v188 = vrot.slane %v184, 4
    %v189 = vsel %vm131, %v185, %v186
    %vm190 = vcmask 1031168
    %v191 = vsel %vm190, %v178, %v189
    %v192 = vsel %vm131, %v186, %v187
    %v193 = vsel %vm190, %v180, %v192
    %v194 = vsel %vm131, %v187, %v188
    %v195 = vsel %vm190, %v182, %v194
    %vm200 = vcmask 1041409
    %vm201 = vsmask.f32 1280
    %vm202 = vmand %vm200, %vm201
    %vm203 = vcmask 1045509
    %vm204 = vsmask.f32 5376
    %vm205 = vmand %vm203, %vm204
    %vm206 = vmor %vm205, %vm202
    %v207 = vld [vmem:[#allocation3] sm:$0x22]
    %v208 = vsel %vm206, %v191, %v207
    %209 = vst [vmem:[#allocation3] sm:$0x22] %v208
    %v210 = vld [vmem:[#allocation3 + $0x8] sm:$0x22]
    %v211 = vsel %vm206, %v193, %v210
    %212 = vst [vmem:[#allocation3 + $0x8] sm:$0x22] %v211
    %v213 = vld [vmem:[#allocation3 + $0x10] sm:$0x22]
    %v214 = vsel %vm206, %v195, %v213
    %215 = vst [vmem:[#allocation3 + $0x10] sm:$0x22] %v214
    %vm216 = vcmask 517121
    %vm217 = vmand %vm216, %vm201
    %v218 = vld [vmem:[#allocation3 + $0x18] sm:$0x2]
    %v219 = vsel %vm217, %v184, %v218
    %220 = vst [vmem:[#allocation3 + $0x18] sm:$0x2] %v219
    %v221 = vrot.slane %v108, 7
    %v222 = vrot.slane %v111, 7
    %v223 = vrot.slane %v114, 7
    %v224 = vrot.slane %v117, 7
    %225 = vrot.lane.b32.xlu0 %v221, 96
    %v226 = vpop.permute.xlu0 %225
    %227 = vrot.lane.b32.xlu0 %v222, 96
    %v228 = vpop.permute.xlu0 %227
    %229 = vrot.lane.b32.xlu0 %v223, 96
    %v230 = vpop.permute.xlu0 %229
    %231 = vrot.lane.b32.xlu0 %v224, 96
    %v232 = vpop.permute.xlu0 %231
    %v233 = vrot.slane %v226, 4
    %v234 = vrot.slane %v228, 4
    %v235 = vrot.slane %v230, 4
    %v236 = vrot.slane %v232, 4
    %v237 = vsel %vm131, %v233, %v234
    %vm238 = vcmask 785408
    %v239 = vsel %vm238, %v226, %v237
    %v240 = vsel %vm131, %v234, %v235
    %v241 = vsel %vm238, %v228, %v240
    %v242 = vsel %vm131, %v235, %v236
    %v243 = vsel %vm238, %v230, %v242
    %vm248 = vsmask.f32 7942
    %vm249 = vmand %vm200, %vm248
    %vm250 = vsmask.f32 7958
    %vm251 = vmand %vm203, %vm250
    %vm252 = vmor %vm251, %vm249
    %v253 = vld [vmem:[#allocation3] sm:$0x22]
    %v254 = vsel %vm252, %v239, %v253
    %255 = vst [vmem:[#allocation3] sm:$0x22] %v254
    %v256 = vld [vmem:[#allocation3 + $0x8] sm:$0x22]
    %v257 = vsel %vm252, %v241, %v256
    %258 = vst [vmem:[#allocation3 + $0x8] sm:$0x22] %v257
    %v259 = vld [vmem:[#allocation3 + $0x10] sm:$0x22]
    %v260 = vsel %vm252, %v243, %v259
    %261 = vst [vmem:[#allocation3 + $0x10] sm:$0x22] %v260
    %vm262 = vmand %vm216, %vm248
    %v263 = vld [vmem:[#allocation3 + $0x18] sm:$0x2]
    %v264 = vsel %vm262, %v232, %v263
    %265 = vst [vmem:[#allocation3 + $0x18] sm:$0x2] %v264
    %v266 = vcombine.low %v35, %v35
    %v268 = vunpack.c.l.s4 1935823168
    %v269 = vunpack.c.0.s8 %v268
    %v270 = vlaneseq
    %v271 = vshrl.u32 %v270, 7
    %v272 = vsub.s32 %v269, %v271
    %v273 = vrot.slane %v266, %v272
    %v274 = vcombine.high %v273, %v273
    %v276 = vunpack.c.l.s4 1935823168
    %v277 = vunpack.c.0.s8 %v276
    %v278 = vlaneseq
    %v279 = vshrl.u32 %v278, 7
    %v280 = vsub.s32 %v277, %v279
    %v281 = vrot.slane %v273, %v280
    %v283 = vunpack.c.l.s4 1935823168
    %v284 = vunpack.c.0.s8 %v283
    %v285 = vlaneseq
    %v286 = vshrl.u32 %v285, 7
    %v287 = vsub.s32 %v284, %v286
    %v288 = vrot.slane %v274, %v287
    %289 = vrot.lane.b32.xlu0 %v281, 95
    %v290 = vpop.permute.xlu0 %289
    %291 = vrot.lane.b32.xlu0 %v288, 95
    %v292 = vpop.permute.xlu0 %291
    %293 = vrot.lane.b32.xlu0 %v60, 95
    %v294 = vpop.permute.xlu0 %293
    %295 = vrot.lane.b32.xlu0 %v67, 95
    %v296 = vpop.permute.xlu0 %295
    %v297 = vrot.slane %v290, 4
    %v298 = vrot.slane %v292, 4
    %v299 = vrot.slane %v294, 4
    %v300 = vrot.slane %v296, 4
    %v301 = vsel %vm131, %v297, %v298
    %vm302 = vcmask 777216
    %v303 = vsel %vm302, %v290, %v301
    %v304 = vsel %vm131, %v298, %v299
    %v305 = vsel %vm302, %v292, %v304
    %v306 = vsel %vm131, %v299, %v300
    %v307 = vsel %vm302, %v294, %v306
    %vm312 = vcmask 1042434
    %vm313 = vsmask.f32 2304
    %vm314 = vmand %vm312, %vm313
    %vm315 = vcmask 1046534
    %vm316 = vsmask.f32 6400
    %vm317 = vmand %vm315, %vm316
    %vm318 = vmor %vm317, %vm314
    %v319 = vld [vmem:[#allocation3] sm:$0x44]
    %v320 = vsel %vm318, %v303, %v319
    %321 = vst [vmem:[#allocation3] sm:$0x44] %v320
    %v322 = vld [vmem:[#allocation3 + $0x8] sm:$0x44]
    %v323 = vsel %vm318, %v305, %v322
    %324 = vst [vmem:[#allocation3 + $0x8] sm:$0x44] %v323
    %v325 = vld [vmem:[#allocation3 + $0x10] sm:$0x44]
    %v326 = vsel %vm318, %v307, %v325
    %327 = vst [vmem:[#allocation3 + $0x10] sm:$0x44] %v326
    %vm328 = vcmask 518146
    %vm329 = vmand %vm328, %vm313
    %v330 = vld [vmem:[#allocation3 + $0x18] sm:$0x4]
    %v331 = vsel %vm329, %v296, %v330
    %332 = vst [vmem:[#allocation3 + $0x18] sm:$0x4] %v331
    %v333 = vrot.slane %v108, 6
    %v334 = vrot.slane %v111, 6
    %v335 = vrot.slane %v114, 6
    %v336 = vrot.slane %v117, 6
    %337 = vrot.lane.b32.xlu0 %v333, 94
    %v338 = vpop.permute.xlu0 %337
    %339 = vrot.lane.b32.xlu0 %v334, 94
    %v340 = vpop.permute.xlu0 %339
    %341 = vrot.lane.b32.xlu0 %v335, 94
    %v342 = vpop.permute.xlu0 %341
    %343 = vrot.lane.b32.xlu0 %v336, 94
    %v344 = vpop.permute.xlu0 %343
    %v345 = vrot.slane %v338, 4
    %v346 = vrot.slane %v340, 4
    %v347 = vrot.slane %v342, 4
    %v348 = vrot.slane %v344, 4
    %v349 = vsel %vm131, %v345, %v346
    %vm350 = vcmask 769024
    %v351 = vsel %vm350, %v338, %v349
    %v352 = vsel %vm131, %v346, %v347
    %v353 = vsel %vm350, %v340, %v352
    %v354 = vsel %vm131, %v347, %v348
    %v355 = vsel %vm350, %v342, %v354
    %vm360 = vsmask.f32 7946
    %vm361 = vmand %vm312, %vm360
    %vm362 = vsmask.f32 7962
    %vm363 = vmand %vm315, %vm362
    %vm364 = vmor %vm363, %vm361
    %v365 = vld [vmem:[#allocation3] sm:$0x44]
    %v366 = vsel %vm364, %v351, %v365
    %367 = vst [vmem:[#allocation3] sm:$0x44] %v366
    %v368 = vld [vmem:[#allocation3 + $0x8] sm:$0x44]
    %v369 = vsel %vm364, %v353, %v368
    %370 = vst [vmem:[#allocation3 + $0x8] sm:$0x44] %v369
    %v371 = vld [vmem:[#allocation3 + $0x10] sm:$0x44]
    %v372 = vsel %vm364, %v355, %v371
    %373 = vst [vmem:[#allocation3 + $0x10] sm:$0x44] %v372
    %vm374 = vmand %vm328, %vm360
    %v375 = vld [vmem:[#allocation3 + $0x18] sm:$0x4]
    %v376 = vsel %vm374, %v344, %v375
    %377 = vst [vmem:[#allocation3 + $0x18] sm:$0x4] %v376
    %v378 = vcombine.low %v273, %v273
    %v380 = vunpack.c.l.s4 1935823168
    %v381 = vunpack.c.0.s8 %v380
    %v382 = vlaneseq
    %v383 = vshrl.u32 %v382, 7
    %v384 = vsub.s32 %v381, %v383
    %v385 = vrot.slane %v378, %v384
    %386 = vrot.lane.b32.xlu0 %v385, 64
    %v387 = vpop.permute.xlu0 %386
    %388 = vrot.lane.b32.xlu0 %v281, 64
    %v389 = vpop.permute.xlu0 %388
    %390 = vrot.lane.b32.xlu0 %v169, 64
    %v391 = vpop.permute.xlu0 %390
    %392 = vrot.lane.b32.xlu0 %v60, 64
    %v393 = vpop.permute.xlu0 %392
    %v394 = vrot.slane %v387, 4
    %v395 = vrot.slane %v389, 4
    %v396 = vrot.slane %v391, 4
    %v397 = vrot.slane %v393, 4
    %v398 = vsel %vm131, %v394, %v395
    %vm399 = vcmask 523264
    %v400 = vsel %vm399, %v387, %v398
    %v401 = vsel %vm131, %v395, %v396
    %v402 = vsel %vm399, %v389, %v401
    %v403 = vsel %vm131, %v396, %v397
    %v404 = vsel %vm399, %v391, %v403
    %vm409 = vcmask 1043459
    %vm410 = vsmask.f32 3328
    %vm411 = vmand %vm409, %vm410
    %vm412 = vcmask 1047559
    %vm413 = vsmask.f32 7424
    %vm414 = vmand %vm412, %vm413
    %vm415 = vmor %vm414, %vm411
    %v416 = vld [vmem:[#allocation3] sm:$0x88]
    %v417 = vsel %vm415, %v400, %v416
    %418 = vst [vmem:[#allocation3] sm:$0x88] %v417
    %v419 = vld [vmem:[#allocation3 + $0x8] sm:$0x88]
    %v420 = vsel %vm415, %v402, %v419
    %421 = vst [vmem:[#allocation3 + $0x8] sm:$0x88] %v420
    %v422 = vld [vmem:[#allocation3 + $0x10] sm:$0x88]
    %v423 = vsel %vm415, %v404, %v422
    %424 = vst [vmem:[#allocation3 + $0x10] sm:$0x88] %v423
    %vm425 = vcmask 519171
    %vm426 = vmand %vm425, %vm410
    %v427 = vld [vmem:[#allocation3 + $0x18] sm:$0x8]
    %v428 = vsel %vm426, %v393, %v427
    %429 = vst [vmem:[#allocation3 + $0x18] sm:$0x8] %v428
    %v430 = vrot.slane %v108, 5
    %v431 = vrot.slane %v111, 5
    %v432 = vrot.slane %v114, 5
    %v433 = vrot.slane %v117, 5
    %434 = vrot.lane.b32.xlu0 %v430, 63
    %v435 = vpop.permute.xlu0 %434
    %436 = vrot.lane.b32.xlu0 %v431, 63
    %v437 = vpop.permute.xlu0 %436
    %438 = vrot.lane.b32.xlu0 %v432, 63
    %v439 = vpop.permute.xlu0 %438
    %440 = vrot.lane.b32.xlu0 %v433, 63
    %v441 = vpop.permute.xlu0 %440
    %v442 = vrot.slane %v435, 4
    %v443 = vrot.slane %v437, 4
    %v444 = vrot.slane %v439, 4
    %v445 = vrot.slane %v441, 4
    %v446 = vsel %vm131, %v442, %v443
    %vm447 = vcmask 515072
    %v448 = vsel %vm447, %v435, %v446
    %v449 = vsel %vm131, %v443, %v444
    %v450 = vsel %vm447, %v437, %v449
    %v451 = vsel %vm131, %v444, %v445
    %v452 = vsel %vm447, %v439, %v451
    %v453 = vsel %vm447, %v441, %v445
    %vm458 = vsmask.f32 7950
    %vm459 = vmand %vm409, %vm458
    %vm460 = vsmask.f32 7966
    %vm461 = vmand %vm412, %vm460
    %vm462 = vmor %vm461, %vm459
    %v463 = vld [vmem:[#allocation3] sm:$0x88]
    %v464 = vsel %vm462, %v448, %v463
    %465 = vst [vmem:[#allocation3] sm:$0x88] %v464
    %v466 = vld [vmem:[#allocation3 + $0x8] sm:$0x88]
    %v467 = vsel %vm462, %v450, %v466
    %468 = vst [vmem:[#allocation3 + $0x8] sm:$0x88] %v467
    %v469 = vld [vmem:[#allocation3 + $0x10] sm:$0x88]
    %v470 = vsel %vm462, %v452, %v469
    %471 = vst [vmem:[#allocation3 + $0x10] sm:$0x88] %v470
    %vm472 = vmand %vm425, %vm458
    %v473 = vld [vmem:[#allocation3 + $0x18] sm:$0x8]
    %v474 = vsel %vm472, %v453, %v473
    %475 = vst [vmem:[#allocation3 + $0x18] sm:$0x8] %v474
    %476 = vrot.lane.b32.xlu0 %v60, 62
    %v477 = vpop.permute.xlu0 %476
    %478 = vrot.lane.b32.xlu0 %v67, 62
    %v479 = vpop.permute.xlu0 %478
    %480 = vrot.lane.b32.xlu0 %v74, 62
    %v481 = vpop.permute.xlu0 %480
    %482 = vrot.lane.b32.xlu0 %v81, 62
    %v483 = vpop.permute.xlu0 %482
    %v484 = vrot.slane %v477, 4
    %v485 = vrot.slane %v479, 4
    %v486 = vrot.slane %v481, 4
    %v487 = vrot.slane %v483, 4
    %v488 = vsel %vm131, %v484, %v485
    %vm489 = vcmask 506880
    %v490 = vsel %vm489, %v477, %v488
    %v491 = vsel %vm131, %v485, %v486
    %v492 = vsel %vm489, %v479, %v491
    %v493 = vsel %vm131, %v486, %v487
    %v494 = vsel %vm489, %v481, %v493
    %v495 = vsel %vm489, %v483, %v487
    %v500 = vld [vmem:[#allocation3 + $0x1c] sm:$0x11]
    %v501 = vsel %vm92, %v490, %v500
    %502 = vst [vmem:[#allocation3 + $0x1c] sm:$0x11] %v501
    %v503 = vld [vmem:[#allocation3 + $0x24] sm:$0x11]
    %v504 = vsel %vm92, %v492, %v503
    %505 = vst [vmem:[#allocation3 + $0x24] sm:$0x11] %v504
    %v506 = vld [vmem:[#allocation3 + $0x2c] sm:$0x11]
    %v507 = vsel %vm92, %v494, %v506
    %508 = vst [vmem:[#allocation3 + $0x2c] sm:$0x11] %v507
    %v509 = vld [vmem:[#allocation3 + $0x34] sm:$0x1]
    %v510 = vsel %vm103, %v495, %v509
    %511 = vst [vmem:[#allocation3 + $0x34] sm:$0x1] %v510
    %v512 = vld [vmem:[%s1] sm:$0x3]
    %v513 = vld [vmem:[#allocation3] sm:$0xff]
    %v514 = vld [vmem:[#allocation3 + $0x8] sm:$0xff]
    %v515 = vld [vmem:[#allocation3 + $0x10] sm:$0xff]
    %v516 = vld [vmem:[#allocation3 + $0x18] sm:$0xf]
    %v517 = vld [vmem:[#allocation3 + $0x1c] sm:$0x11]
    %v518 = vld [vmem:[#allocation3 + $0x24] sm:$0x11]
    %v519 = vld [vmem:[#allocation3 + $0x2c] sm:$0x11]
    %v520 = vld [vmem:[#allocation3 + $0x34] sm:$0x1]
    %v529 = vunpack.c.l.b16 %v513
    %v530 = vunpack.c.h.b16 %v513
    %v531 = vunpack.c.l.b16 %v514
    %v532 = vunpack.c.h.b16 %v514
    %v533 = vunpack.c.l.b16 %v515
    %v534 = vunpack.c.h.b16 %v515
    %v535 = vunpack.c.l.b16 %v516
    %v536 = vunpack.c.l.b16 %v517
    %v537 = vunpack.c.h.b16 %v517
    %v538 = vunpack.c.l.b16 %v518
    %v539 = vunpack.c.h.b16 %v518
    %v540 = vunpack.c.l.b16 %v519
    %v541 = vunpack.c.h.b16 %v519
    %v542 = vunpack.c.l.b16 %v520
    %v543 = vpack.c.b16 %v536, %v529
    %v544 = vpack.c.b16 %v537, %v530
    %v545 = vpack.c.b16 %v538, %v531
    %v546 = vpack.c.b16 %v539, %v532
    %v547 = vpack.c.b16 %v540, %v533
    %v548 = vpack.c.b16 %v541, %v534
    %v549 = vpack.c.b16 %v542, %v535
    %vm550 = vcmask 72704
    %v552 = vsel %vm550, %v512, 0
    %vm554 = vcmask 1043456
    %vm555 = vcmask 1044480
    %v556 = vsel %vm554, 4294967295, 65535
    %v557 = vsel %vm555, %v556, 0
    %v559 = vand.u32 %v543, %v557
    %v562 = vand.u32 %v544, %v557
    %v565 = vand.u32 %v545, %v557
    %v568 = vand.u32 %v546, %v557
    %v571 = vand.u32 %v547, %v557
    %v574 = vand.u32 %v548, %v557
    %v577 = vand.u32 %v549, %v557
    %579 = vmatprep.subr.bf16.mxu0 %v562
    %580 = vmatpush1.bf16.msra.mxu0 %v559
    %581 = vmatprep.subr.bf16.mxu0 0
    %582 = vmatpush1.bf16.msra.mxu0 0
    %583 = vmatprep.subr.bf16.mxu0 0
    %584 = vmatpush1.bf16.msra.mxu0 0
    %585 = vmatprep.subr.bf16.mxu0 0
    %586 = vmatpush1.bf16.msra.mxu0 0
    %587 = vmatprep.subr.bf16.mxu0 0
    %588 = vmatpush1.bf16.msra.mxu0 0
    %589 = vmatprep.subr.bf16.mxu0 0
    %590 = vmatpush1.bf16.msra.mxu0 0
    %591 = vmatprep.subr.bf16.mxu0 0
    %592 = vmatpush1.bf16.msra.mxu0 0
    %593 = vmatprep.subr.bf16.mxu0 0
    %594 = vmatpush1.bf16.msra.mxu0 0
    %595 = vmatprep.subr.bf16.mxu0 0
    %596 = vmatpush1.bf16.msra.mxu0 0
    %597 = vmatprep.subr.bf16.mxu0 0
    %598 = vmatpush1.bf16.msra.mxu0 0
    %599 = vmatprep.subr.bf16.mxu0 0
    %600 = vmatpush1.bf16.msra.mxu0 0
    %601 = vmatprep.subr.bf16.mxu0 0
    %602 = vmatpush1.bf16.msra.mxu0 0
    %603 = vmatprep.subr.bf16.mxu0 0
    %604 = vmatpush1.bf16.msra.mxu0 0
    %605 = vmatprep.subr.bf16.mxu0 0
    %606 = vmatpush1.bf16.msra.mxu0 0
    %607 = vmatprep.subr.bf16.mxu0 0
    %608 = vmatpush1.bf16.msra.mxu0 0
    %609 = vmatprep.subr.bf16.mxu0 0
    %610 = vmatpush1.bf16.msra.mxu0 0
    %611 = vmatprep.mubr.bf16.mxu0 0
    %612 = vmatmul.mubr.bf16.gmra.mrb[0].mxu0 %v552
    %v613 = vpop.f32.mrb[0].mxu0
    %v614 = vadd.f32 0.0, %v613
    %v615 = vpop.f32.mrb[0].mxu0
    %v616 = vadd.f32 0.0, %v615
    %v617 = vpop.f32.mrb[0].mxu0
    %v618 = vpop.f32.mrb[0].mxu0
    %619 = vdwg.mxu0
    %620 = vmatprep.subr.bf16.mxu0 %v568
    %621 = vmatpush1.bf16.msra.mxu0 %v565
    %622 = vmatprep.subr.bf16.mxu0 0
    %623 = vmatpush1.bf16.msra.mxu0 0
    %624 = vmatprep.subr.bf16.mxu0 0
    %625 = vmatpush1.bf16.msra.mxu0 0
    %626 = vmatprep.subr.bf16.mxu0 0
    %627 = vmatpush1.bf16.msra.mxu0 0
    %628 = vmatprep.subr.bf16.mxu0 0
    %629 = vmatpush1.bf16.msra.mxu0 0
    %630 = vmatprep.subr.bf16.mxu0 0
    %631 = vmatpush1.bf16.msra.mxu0 0
    %632 = vmatprep.subr.bf16.mxu0 0
    %633 = vmatpush1.bf16.msra.mxu0 0
    %634 = vmatprep.subr.bf16.mxu0 0
    %635 = vmatpush1.bf16.msra.mxu0 0
    %636 = vmatprep.subr.bf16.mxu0 0
    %637 = vmatpush1.bf16.msra.mxu0 0
    %638 = vmatprep.subr.bf16.mxu0 0
    %639 = vmatpush1.bf16.msra.mxu0 0
    %640 = vmatprep.subr.bf16.mxu0 0
    %641 = vmatpush1.bf16.msra.mxu0 0
    %642 = vmatprep.subr.bf16.mxu0 0
    %643 = vmatpush1.bf16.msra.mxu0 0
    %644 = vmatprep.subr.bf16.mxu0 0
    %645 = vmatpush1.bf16.msra.mxu0 0
    %646 = vmatprep.subr.bf16.mxu0 0
    %647 = vmatpush1.bf16.msra.mxu0 0
    %648 = vmatprep.subr.bf16.mxu0 0
    %649 = vmatpush1.bf16.msra.mxu0 0
    %650 = vmatprep.subr.bf16.mxu0 0
    %651 = vmatpush1.bf16.msra.mxu0 0
    %652 = vmatprep.mubr.bf16.mxu0 0
    %653 = vmatmul.mubr.bf16.gmra.mrb[0].mxu0 %v552
    %v654 = vpop.f32.mrb[0].mxu0
    %v655 = vadd.f32 0.0, %v654
    %v656 = vpop.f32.mrb[0].mxu0
    %v657 = vadd.f32 0.0, %v656
    %v658 = vpop.f32.mrb[0].mxu0
    %v659 = vpop.f32.mrb[0].mxu0
    %660 = vdwg.mxu0
    %661 = vmatprep.subr.bf16.mxu0 %v574
    %662 = vmatpush1.bf16.msra.mxu0 %v571
    %663 = vmatprep.subr.bf16.mxu0 0
    %664 = vmatpush1.bf16.msra.mxu0 0
    %665 = vmatprep.subr.bf16.mxu0 0
    %666 = vmatpush1.bf16.msra.mxu0 0
    %667 = vmatprep.subr.bf16.mxu0 0
    %668 = vmatpush1.bf16.msra.mxu0 0
    %669 = vmatprep.subr.bf16.mxu0 0
    %670 = vmatpush1.bf16.msra.mxu0 0
    %671 = vmatprep.subr.bf16.mxu0 0
    %672 = vmatpush1.bf16.msra.mxu0 0
    %673 = vmatprep.subr.bf16.mxu0 0
    %674 = vmatpush1.bf16.msra.mxu0 0
    %675 = vmatprep.subr.bf16.mxu0 0
    %676 = vmatpush1.bf16.msra.mxu0 0
    %677 = vmatprep.subr.bf16.mxu0 0
    %678 = vmatpush1.bf16.msra.mxu0 0
    %679 = vmatprep.subr.bf16.mxu0 0
    %680 = vmatpush1.bf16.msra.mxu0 0
    %681 = vmatprep.subr.bf16.mxu0 0
    %682 = vmatpush1.bf16.msra.mxu0 0
    %683 = vmatprep.subr.bf16.mxu0 0
    %684 = vmatpush1.bf16.msra.mxu0 0
    %685 = vmatprep.subr.bf16.mxu0 0
    %686 = vmatpush1.bf16.msra.mxu0 0
    %687 = vmatprep.subr.bf16.mxu0 0
    %688 = vmatpush1.bf16.msra.mxu0 0
    %689 = vmatprep.subr.bf16.mxu0 0
    %690 = vmatpush1.bf16.msra.mxu0 0
    %691 = vmatprep.subr.bf16.mxu0 0
    %692 = vmatpush1.bf16.msra.mxu0 0
    %693 = vmatprep.mubr.bf16.mxu0 0
    %694 = vmatmul.mubr.bf16.gmra.mrb[0].mxu0 %v552
    %v695 = vpop.f32.mrb[0].mxu0
    %v696 = vadd.f32 0.0, %v695
    %v697 = vpop.f32.mrb[0].mxu0
    %v698 = vadd.f32 0.0, %v697
    %v699 = vpop.f32.mrb[0].mxu0
    %v700 = vpop.f32.mrb[0].mxu0
    %701 = vdwg.mxu0
    %702 = vmatprep.subr.bf16.mxu0 0
    %703 = vmatpush1.bf16.msra.mxu0 %v577
    %704 = vmatprep.subr.bf16.mxu0 0
    %705 = vmatpush1.bf16.msra.mxu0 0
    %706 = vmatprep.subr.bf16.mxu0 0
    %707 = vmatpush1.bf16.msra.mxu0 0
    %708 = vmatprep.subr.bf16.mxu0 0
    %709 = vmatpush1.bf16.msra.mxu0 0
    %710 = vmatprep.subr.bf16.mxu0 0
    %711 = vmatpush1.bf16.msra.mxu0 0
    %712 = vmatprep.subr.bf16.mxu0 0
    %713 = vmatpush1.bf16.msra.mxu0 0
    %714 = vmatprep.subr.bf16.mxu0 0
    %715 = vmatpush1.bf16.msra.mxu0 0
    %716 = vmatprep.subr.bf16.mxu0 0
    %717 = vmatpush1.bf16.msra.mxu0 0
    %718 = vmatprep.subr.bf16.mxu0 0
    %719 = vmatpush1.bf16.msra.mxu0 0
    %720 = vmatprep.subr.bf16.mxu0 0
    %721 = vmatpush1.bf16.msra.mxu0 0
    %722 = vmatprep.subr.bf16.mxu0 0
    %723 = vmatpush1.bf16.msra.mxu0 0
    %724 = vmatprep.subr.bf16.mxu0 0
    %725 = vmatpush1.bf16.msra.mxu0 0
    %726 = vmatprep.subr.bf16.mxu0 0
    %727 = vmatpush1.bf16.msra.mxu0 0
    %728 = vmatprep.subr.bf16.mxu0 0
    %729 = vmatpush1.bf16.msra.mxu0 0
    %730 = vmatprep.subr.bf16.mxu0 0
    %731 = vmatpush1.bf16.msra.mxu0 0
    %732 = vmatprep.subr.bf16.mxu0 0
    %733 = vmatpush1.bf16.msra.mxu0 0
    %734 = vmatprep.mubr.bf16.mxu0 0
    %735 = vmatmul.mubr.bf16.gmra.mrb[0].mxu0 %v552
    %v736 = vpop.f32.mrb[0].mxu0
    %v737 = vadd.f32 0.0, %v736
    %v738 = vpop.f32.mrb[0].mxu0
    %v739 = vpop.f32.mrb[0].mxu0
    %v740 = vpop.f32.mrb[0].mxu0
    %741 = vdwg.mxu0
    %v748 = vcombine.low %v614, %v616
    %v749 = vcombine.low %v655, %v657
    %v750 = vcombine.low %v696, %v698
    %s754 = smul.u32 %s26, 7
    %s755 = smul.addr %s754, 4
    %s756 = scalar_lea.vmem [#allocation2], %s755
    %757 = vst [vmem:[%s756] sm:$0xff] %v748
    %758 = vst [vmem:[%s756 + $0x8] sm:$0xff] %v749
    %759 = vst [vmem:[%s756 + $0x10] sm:$0xff] %v750
    %vm760 = vcmask 519168
    %761 = vst.msk [vmem:[%s756 + $0x18] sm:$0xf] %vm760, %v737
    %v763 = vlaneseq
    %v764 = vshrl.u32 %v763, 7
    %v765 = vsub.s32 0, %v764
    %v766 = vrot.slane %v24, %v765
    %v767 = vlaneseq
    %v768 = vshrl.u32 %v767, 7
    %v769 = vsub.s32 1, %v768
    %v770 = vrot.slane %v24, %v769
    %v771 = vlaneseq
    %v772 = vshrl.u32 %v771, 7
    %v773 = vsub.s32 2, %v772
    %v774 = vrot.slane %v24, %v773
    %v775 = vlaneseq
    %v776 = vshrl.u32 %v775, 7
    %v777 = vsub.s32 3, %v776
    %v778 = vrot.slane %v24, %v777
    %v779 = vlaneseq
    %v780 = vshrl.u32 %v779, 7
    %v781 = vsub.s32 4, %v780
    %v782 = vrot.slane %v24, %v781
    %v783 = vlaneseq
    %v784 = vshrl.u32 %v783, 7
    %v785 = vsub.s32 5, %v784
    %v786 = vrot.slane %v24, %v785
    %v787 = vlaneseq
    %v788 = vshrl.u32 %v787, 7
    %v789 = vsub.s32 6, %v788
    %v790 = vrot.slane %v24, %v789
    %v798 = vmul.f32 %v614, %v766
    %v799 = vmul.f32 %v616, %v770
    %v800 = vmul.f32 %v655, %v774
    %v801 = vmul.f32 %v657, %v778
    %v802 = vmul.f32 %v696, %v782
    %v803 = vmul.f32 %v698, %v786
    %v804 = vmul.f32 %v737, %v790
    %v805 = vsel %vm554, %v798, 0.0
    %v806 = vsel %vm554, %v799, 0.0
    %v807 = vadd.f32 %v805, %v806
    %v808 = vsel %vm554, %v800, 0.0
    %v809 = vadd.f32 %v807, %v808
    %v810 = vsel %vm554, %v801, 0.0
    %v811 = vadd.f32 %v809, %v810
    %v812 = vsel %vm554, %v802, 0.0
    %v813 = vadd.f32 %v811, %v812
    %v814 = vsel %vm554, %v803, 0.0
    %v815 = vadd.f32 %v813, %v814
    %v816 = vsel %vm760, %v804, 0.0
    %v817 = vadd.f32 %v815, %v816
    %818 = vadd.xlane.f32.xlu0 %v817
    %v819 = vpop.xlane.xlu0 %818
    %v820 = vadd.f32 %v31, %v819
    %v821 = vmul.f32 %v798, %v614
    %v822 = vmul.f32 %v799, %v616
    %v823 = vmul.f32 %v800, %v655
    %v824 = vmul.f32 %v801, %v657
    %v825 = vmul.f32 %v802, %v696
    %v826 = vmul.f32 %v803, %v698
    %v827 = vmul.f32 %v804, %v737
    %v828 = vsel %vm554, %v821, 0.0
    %v829 = vsel %vm554, %v822, 0.0
    %v830 = vadd.f32 %v828, %v829
    %v831 = vsel %vm554, %v823, 0.0
    %v832 = vadd.f32 %v830, %v831
    %v833 = vsel %vm554, %v824, 0.0
    %v834 = vadd.f32 %v832, %v833
    %v835 = vsel %vm554, %v825, 0.0
    %v836 = vadd.f32 %v834, %v835
    %v837 = vsel %vm554, %v826, 0.0
    %v838 = vadd.f32 %v836, %v837
    %v839 = vsel %vm760, %v827, 0.0
    %v840 = vadd.f32 %v838, %v839
    %841 = vadd.xlane.f32.xlu0 %v840
    %v842 = vpop.xlane.xlu0 %841
    %v843 = vadd.f32 %v32, %v842
  $region30: #{a_call__.3} parent=0 // loop_footer
    %s30 = sadd.s32 1, %s26
  $region31: #{a_call__.3} parent=0 // loop_footer_branch
    %25 = sbr.rel target = $region27
  $region32: #{a_call__.3} parent=0 // loop_exit
    _
  %v844 = vmul.f32 %v31, 0.000739645
  %v845 = vmul.f32 %v32, 0.000739645
  %v846 = vmul.f32 %v844, %v844
  %v847 = vsub.f32 %v845, %v846
  %v848 = vmax.f32 %v847, 0.0
  %v849 = vld [vmem:[%s4] sm:$0xf]
  %v850 = vadd.f32 %v848, 1e-05
  %v851 = vrsqrt.pop %v850
  %v852 = vmul.f32 %v849, %v851
  %v853 = vld [vmem:[%s5] sm:$0xf]
  %v854 = vmul.f32 %v844, %v852
  %v855 = vsub.f32 %v853, %v854
  loop: start=0, step=1, limit=2
  $region33: #{a_call__.3} parent=0 // loop_pre_header
    _
  $region34: #{a_call__.3} parent=0 // loop_header
    %s857 = sphi 0, %s861
    %p858 = scmp.ge.s32.totalorder %s857, 2
  $region35: #{a_call__.3} parent=0 // loop_header_branch
    %860 = sbr.rel (%p858) target = $region39
  $region36: #{a_call__.3} parent=0 // loop_body
    %s862 = smul.u32 %s857, 7
    %s863 = smul.addr %s862, 4
    %s864 = scalar_lea.vmem [#allocation2], %s863
    %v865 = vld [vmem:[%s864] sm:$0xff]
    %v866 = vld [vmem:[%s864 + $0x8] sm:$0xff]
    %v867 = vld [vmem:[%s864 + $0x10] sm:$0xff]
    %v868 = vld [vmem:[%s864 + $0x18] sm:$0xf]
    %870 = vset.pattern.permute.xlu0 0
    %871 = vperm.xlu0 %870, %v852
    %v872 = vpop.permute.xlu0 %871
    %v874 = vunpack.c.l.s4 839922192
    %v875 = vunpack.c.0.s8 %v874
    %v876 = vlaneseq
    %v877 = vshrl.u32 %v876, 7
    %v878 = vsub.s32 %v875, %v877
    %v879 = vrot.slane %v872, %v878
    %v881 = vmul.f32 %v865, %v879
    %v882 = vmul.f32 %v866, %v879
    %v883 = vmul.f32 %v867, %v879
    %v884 = vmul.f32 %v868, %v879
    %886 = vset.pattern.permute.xlu0 0
    %887 = vperm.xlu0 %886, %v855
    %v888 = vpop.permute.xlu0 %887
    %v890 = vunpack.c.l.s4 839922192
    %v891 = vunpack.c.0.s8 %v890
    %v892 = vlaneseq
    %v893 = vshrl.u32 %v892, 7
    %v894 = vsub.s32 %v891, %v893
    %v895 = vrot.slane %v888, %v894
    %v897 = vadd.f32 %v881, %v895
    %v898 = vadd.f32 %v882, %v895
    %v899 = vadd.f32 %v883, %v895
    %v900 = vadd.f32 %v884, %v895
    %905 = vrot.lane.b32.xlu0 %v897, 127
    %v906 = vpop.permute.xlu0 %905
    %907 = vrot.lane.b32.xlu0 %v898, 127
    %v908 = vpop.permute.xlu0 %907
    %909 = vrot.lane.b32.xlu0 %v899, 127
    %v910 = vpop.permute.xlu0 %909
    %911 = vrot.lane.b32.xlu0 %v900, 127
    %v912 = vpop.permute.xlu0 %911
    %v913 = vrot.slane %v906, 4
    %v914 = vrot.slane %v908, 4
    %v915 = vrot.slane %v910, 4
    %v916 = vrot.slane %v912, 4
    %vm917 = vcmask 1043456
    %v918 = vsel %vm917, %v913, %v914
    %vm919 = vcmask 1039360
    %v920 = vsel %vm919, %v906, %v918
    %v921 = vsel %vm917, %v914, %v915
    %v922 = vsel %vm919, %v908, %v921
    %v923 = vsel %vm917, %v915, %v916
    %v924 = vsel %vm919, %v910, %v923
    %v929 = vmax.f32 %v897, %v920
    %v930 = vmax.f32 %v898, %v922
    %v931 = vmax.f32 %v899, %v924
    %v932 = vmax.f32 %v900, %v912
    %933 = vrot.lane.b32.xlu0 %v897, 96
    %v934 = vpop.permute.xlu0 %933
    %935 = vrot.lane.b32.xlu0 %v898, 96
    %v936 = vpop.permute.xlu0 %935
    %937 = vrot.lane.b32.xlu0 %v899, 96
    %v938 = vpop.permute.xlu0 %937
    %939 = vrot.lane.b32.xlu0 %v900, 96
    %v940 = vpop.permute.xlu0 %939
    %v941 = vrot.slane %v934, 4
    %v942 = vrot.slane %v936, 4
    %v943 = vrot.slane %v938, 4
    %v944 = vrot.slane %v940, 4
    %v945 = vsel %vm917, %v941, %v942
    %vm946 = vcmask 785408
    %v947 = vsel %vm946, %v934, %v945
    %v948 = vsel %vm917, %v942, %v943
    %v949 = vsel %vm946, %v936, %v948
    %v950 = vsel %vm917, %v943, %v944
    %v951 = vsel %vm946, %v938, %v950
    %v956 = vmax.f32 %v929, %v947
    %v957 = vmax.f32 %v930, %v949
    %v958 = vmax.f32 %v931, %v951
    %v959 = vmax.f32 %v932, %v940
    %960 = vrot.lane.b32.xlu0 %v897, 95
    %v961 = vpop.permute.xlu0 %960
    %962 = vrot.lane.b32.xlu0 %v898, 95
    %v963 = vpop.permute.xlu0 %962
    %964 = vrot.lane.b32.xlu0 %v899, 95
    %v965 = vpop.permute.xlu0 %964
    %966 = vrot.lane.b32.xlu0 %v900, 95
    %v967 = vpop.permute.xlu0 %966
    %v968 = vrot.slane %v961, 4
    %v969 = vrot.slane %v963, 4
    %v970 = vrot.slane %v965, 4
    %v971 = vrot.slane %v967, 4
    %v972 = vsel %vm917, %v968, %v969
    %vm973 = vcmask 777216
    %v974 = vsel %vm973, %v961, %v972
    %v975 = vsel %vm917, %v969, %v970
    %v976 = vsel %vm973, %v963, %v975
    %v977 = vsel %vm917, %v970, %v971
    %v978 = vsel %vm973, %v965, %v977
    %v983 = vmax.f32 %v956, %v974
    %v984 = vmax.f32 %v957, %v976
    %v985 = vmax.f32 %v958, %v978
    %v986 = vmax.f32 %v959, %v967
    %v987 = vld [vmem:[%s3] sm:$0xff]
    %v988 = vld [vmem:[%s3 + $0x8] sm:$0xff]
    %v989 = vld [vmem:[%s3 + $0x10] sm:$0xff]
    %v990 = vld [vmem:[%s3 + $0x18] sm:$0xff]
    %v991 = vld [vmem:[%s3 + $0x20] sm:$0xff]
    %v992 = vld [vmem:[%s3 + $0x28] sm:$0xff]
    %v993 = vld [vmem:[%s3 + $0x30] sm:$0xff]
    %v994 = vld [vmem:[%s3 + $0x38] sm:$0xff]
    %v995 = vld [vmem:[%s3 + $0x40] sm:$0xff]
    %v996 = vld [vmem:[%s3 + $0x48] sm:$0xff]
    %v997 = vld [vmem:[%s3 + $0x50] sm:$0xff]
    %v998 = vld [vmem:[%s3 + $0x58] sm:$0xff]
    %v999 = vld [vmem:[%s3 + $0x60] sm:$0xff]
    %v1000 = vld [vmem:[%s3 + $0x68] sm:$0xff]
    %v1001 = vld [vmem:[%s3 + $0x70] sm:$0xff]
    %v1002 = vld [vmem:[%s3 + $0x78] sm:$0xff]
    %v1003 = vld [vmem:[%s3 + $0x80] sm:$0xff]
    %v1004 = vld [vmem:[%s3 + $0x88] sm:$0xff]
    %v1005 = vld [vmem:[%s3 + $0x90] sm:$0xff]
    %v1006 = vld [vmem:[%s3 + $0x98] sm:$0xff]
    %v1007 = vld [vmem:[%s3 + $0xa0] sm:$0xff]
    %v1008 = vld [vmem:[%s3 + $0xa8] sm:$0xff]
    %v1009 = vld [vmem:[%s3 + $0xb0] sm:$0xff]
    %v1010 = vld [vmem:[%s3 + $0xb8] sm:$0xff]
    %v1011 = vld [vmem:[%s3 + $0xc0] sm:$0xff]
    %v1012 = vld [vmem:[%s3 + $0xc8] sm:$0xff]
    %v1013 = vld [vmem:[%s3 + $0xd0] sm:$0xff]
    %v1014 = vld [vmem:[%s3 + $0xd8] sm:$0xff]
    %v1015 = vld [vmem:[%s3 + $0xe0] sm:$0xff]
    %v1016 = vld [vmem:[%s3 + $0xe8] sm:$0xff]
    %v1017 = vld [vmem:[%s3 + $0xf0] sm:$0xff]
    %v1018 = vld [vmem:[%s3 + $0xf8] sm:$0xff]
    %v1019 = vld [vmem:[%s3 + $0x100] sm:$0xff]
    %v1020 = vld [vmem:[%s3 + $0x108] sm:$0xff]
    %v1021 = vld [vmem:[%s3 + $0x110] sm:$0xff]
    %v1022 = vld [vmem:[%s3 + $0x118] sm:$0xff]
    %v1023 = vld [vmem:[%s3 + $0x120] sm:$0xff]
    %v1024 = vld [vmem:[%s3 + $0x128] sm:$0xff]
    %v1025 = vld [vmem:[%s3 + $0x130] sm:$0xff]
    %v1026 = vld [vmem:[%s3 + $0x138] sm:$0xff]
    %v1027 = vld [vmem:[%s3 + $0x140] sm:$0xff]
    %v1028 = vld [vmem:[%s3 + $0x148] sm:$0xff]
    %v1029 = vld [vmem:[%s3 + $0x150] sm:$0xff]
    %v1030 = vld [vmem:[%s3 + $0x158] sm:$0xff]
    %v1031 = vld [vmem:[%s3 + $0x160] sm:$0xff]
    %v1032 = vld [vmem:[%s3 + $0x168] sm:$0xff]
    %v1033 = vld [vmem:[%s3 + $0x170] sm:$0xff]
    %v1034 = vld [vmem:[%s3 + $0x178] sm:$0xff]
    %v1035 = vld [vmem:[%s3 + $0x180] sm:$0xff]
    %v1036 = vld [vmem:[%s3 + $0x188] sm:$0xff]
    %v1037 = vld [vmem:[%s3 + $0x190] sm:$0xff]
    %v1038 = vld [vmem:[%s3 + $0x198] sm:$0xff]
    %v1039 = vld [vmem:[%s3 + $0x1a0] sm:$0xff]
    %v1040 = vld [vmem:[%s3 + $0x1a8] sm:$0xff]
    %v1041 = vld [vmem:[%s3 + $0x1b0] sm:$0xff]
    %v1042 = vld [vmem:[%s3 + $0x1b8] sm:$0xff]
    %v1043 = vld [vmem:[%s3 + $0x1c0] sm:$0xff]
    %v1044 = vld [vmem:[%s3 + $0x1c8] sm:$0xff]
    %v1045 = vld [vmem:[%s3 + $0x1d0] sm:$0xff]
    %v1046 = vld [vmem:[%s3 + $0x1d8] sm:$0xff]
    %v1047 = vld [vmem:[%s3 + $0x1e0] sm:$0xff]
    %v1048 = vld [vmem:[%s3 + $0x1e8] sm:$0xff]
    %v1049 = vld [vmem:[%s3 + $0x1f0] sm:$0xff]
    %v1050 = vld [vmem:[%s3 + $0x1f8] sm:$0xff]
    %v1051 = vld [vmem:[%s3 + $0x200] sm:$0xff]
    %v1052 = vld [vmem:[%s3 + $0x208] sm:$0xff]
    %v1053 = vld [vmem:[%s3 + $0x210] sm:$0xff]
    %v1054 = vld [vmem:[%s3 + $0x218] sm:$0xff]
    %v1055 = vld [vmem:[%s3 + $0x220] sm:$0xff]
    %v1056 = vld [vmem:[%s3 + $0x228] sm:$0xff]
    %v1057 = vld [vmem:[%s3 + $0x230] sm:$0xff]
    %v1058 = vld [vmem:[%s3 + $0x238] sm:$0xff]
    %v1059 = vld [vmem:[%s3 + $0x240] sm:$0xff]
    %v1060 = vld [vmem:[%s3 + $0x248] sm:$0xff]
    %v1061 = vld [vmem:[%s3 + $0x250] sm:$0xff]
    %v1062 = vld [vmem:[%s3 + $0x258] sm:$0xff]
    %v1063 = vld [vmem:[%s3 + $0x260] sm:$0xff]
    %v1064 = vld [vmem:[%s3 + $0x268] sm:$0xff]
    %v1065 = vld [vmem:[%s3 + $0x270] sm:$0xff]
    %v1066 = vld [vmem:[%s3 + $0x278] sm:$0xff]
    %v1067 = vld [vmem:[%s3 + $0x280] sm:$0xff]
    %v1068 = vld [vmem:[%s3 + $0x288] sm:$0xff]
    %v1069 = vld [vmem:[%s3 + $0x290] sm:$0xff]
    %v1070 = vld [vmem:[%s3 + $0x298] sm:$0xff]
    %v1071 = vld [vmem:[%s3 + $0x2a0] sm:$0xff]
    %v1072 = vld [vmem:[%s3 + $0x2a8] sm:$0xff]
    %v1073 = vld [vmem:[%s3 + $0x2b0] sm:$0xff]
    %v1074 = vld [vmem:[%s3 + $0x2b8] sm:$0xff]
    %v1075 = vld [vmem:[%s3 + $0x2c0] sm:$0xff]
    %v1076 = vld [vmem:[%s3 + $0x2c8] sm:$0xff]
    %v1077 = vld [vmem:[%s3 + $0x2d0] sm:$0xff]
    %v1078 = vld [vmem:[%s3 + $0x2d8] sm:$0xff]
    %v1079 = vld [vmem:[%s3 + $0x2e0] sm:$0xff]
    %v1080 = vld [vmem:[%s3 + $0x2e8] sm:$0xff]
    %v1081 = vld [vmem:[%s3 + $0x2f0] sm:$0xff]
    %v1082 = vld [vmem:[%s3 + $0x2f8] sm:$0xff]
    %v1083 = vld [vmem:[%s3 + $0x300] sm:$0xff]
    %v1084 = vld [vmem:[%s3 + $0x308] sm:$0xff]
    %v1085 = vld [vmem:[%s3 + $0x310] sm:$0xff]
    %v1086 = vld [vmem:[%s3 + $0x318] sm:$0xff]
    %v1087 = vld [vmem:[%s3 + $0x320] sm:$0xff]
    %v1088 = vld [vmem:[%s3 + $0x328] sm:$0xff]
    %v1089 = vld [vmem:[%s3 + $0x330] sm:$0xff]
    %v1090 = vld [vmem:[%s3 + $0x338] sm:$0xff]
    %v1091 = vld [vmem:[%s3 + $0x340] sm:$0xff]
    %v1092 = vld [vmem:[%s3 + $0x348] sm:$0xff]
    %v1093 = vld [vmem:[%s3 + $0x350] sm:$0xff]
    %v1094 = vld [vmem:[%s3 + $0x358] sm:$0xff]
    %v1095 = vld [vmem:[%s3 + $0x360] sm:$0xff]
    %v1096 = vld [vmem:[%s3 + $0x368] sm:$0xff]
    %v1097 = vld [vmem:[%s3 + $0x370] sm:$0xff]
    %v1098 = vld [vmem:[%s3 + $0x378] sm:$0xff]
    %v1099 = vld [vmem:[%s3 + $0x380] sm:$0xff]
    %v1100 = vld [vmem:[%s3 + $0x388] sm:$0xff]
    %v1101 = vld [vmem:[%s3 + $0x390] sm:$0xff]
    %v1102 = vld [vmem:[%s3 + $0x398] sm:$0xff]
    %v1103 = vld [vmem:[%s3 + $0x3a0] sm:$0xff]
    %v1104 = vld [vmem:[%s3 + $0x3a8] sm:$0xff]
    %v1105 = vld [vmem:[%s3 + $0x3b0] sm:$0xff]
    %v1106 = vld [vmem:[%s3 + $0x3b8] sm:$0xff]
    %v1107 = vld [vmem:[%s3 + $0x3c0] sm:$0xff]
    %v1108 = vld [vmem:[%s3 + $0x3c8] sm:$0xff]
    %v1109 = vld [vmem:[%s3 + $0x3d0] sm:$0xff]
    %v1110 = vld [vmem:[%s3 + $0x3d8] sm:$0xff]
    %v1111 = vld [vmem:[%s3 + $0x3e0] sm:$0xff]
    %v1112 = vld [vmem:[%s3 + $0x3e8] sm:$0xff]
    %v1113 = vld [vmem:[%s3 + $0x3f0] sm:$0xff]
    %v1114 = vld [vmem:[%s3 + $0x3f8] sm:$0xff]
    %v1115 = vld [vmem:[%s3 + $0x400] sm:$0xff]
    %v1116 = vld [vmem:[%s3 + $0x408] sm:$0xff]
    %v1117 = vld [vmem:[%s3 + $0x410] sm:$0xff]
    %v1118 = vld [vmem:[%s3 + $0x418] sm:$0xff]
    %v1119 = vld [vmem:[%s3 + $0x420] sm:$0xff]
    %v1120 = vld [vmem:[%s3 + $0x428] sm:$0xff]
    %v1121 = vld [vmem:[%s3 + $0x430] sm:$0xff]
    %v1122 = vld [vmem:[%s3 + $0x438] sm:$0xff]
    %v1123 = vld [vmem:[%s3 + $0x440] sm:$0xff]
    %v1124 = vld [vmem:[%s3 + $0x448] sm:$0xff]
    %v1125 = vld [vmem:[%s3 + $0x450] sm:$0xff]
    %v1126 = vld [vmem:[%s3 + $0x458] sm:$0xff]
    %v1127 = vld [vmem:[%s3 + $0x460] sm:$0xff]
    %v1128 = vld [vmem:[%s3 + $0x468] sm:$0xff]
    %v1129 = vld [vmem:[%s3 + $0x470] sm:$0xff]
    %v1130 = vld [vmem:[%s3 + $0x478] sm:$0xff]
    %v1131 = vld [vmem:[%s3 + $0x480] sm:$0xff]
    %v1132 = vld [vmem:[%s3 + $0x488] sm:$0xff]
    %v1133 = vld [vmem:[%s3 + $0x490] sm:$0xff]
    %v1134 = vld [vmem:[%s3 + $0x498] sm:$0xff]
    %v1135 = vld [vmem:[%s3 + $0x4a0] sm:$0xff]
    %v1136 = vld [vmem:[%s3 + $0x4a8] sm:$0xff]
    %v1137 = vld [vmem:[%s3 + $0x4b0] sm:$0xff]
    %v1138 = vld [vmem:[%s3 + $0x4b8] sm:$0xff]
    %v1139 = vld [vmem:[%s3 + $0x4c0] sm:$0xff]
    %v1140 = vld [vmem:[%s3 + $0x4c8] sm:$0xff]
    %v1141 = vld [vmem:[%s3 + $0x4d0] sm:$0xff]
    %v1142 = vld [vmem:[%s3 + $0x4d8] sm:$0xff]
    %v1143 = vld [vmem:[%s3 + $0x4e0] sm:$0xff]
    %v1144 = vld [vmem:[%s3 + $0x4e8] sm:$0xff]
    %v1145 = vld [vmem:[%s3 + $0x4f0] sm:$0xff]
    %v1146 = vld [vmem:[%s3 + $0x4f8] sm:$0xff]
    %v1147 = vld [vmem:[%s3 + $0x500] sm:$0xff]
    %v1148 = vld [vmem:[%s3 + $0x508] sm:$0xff]
    %v1149 = vld [vmem:[%s3 + $0x510] sm:$0xff]
    %v1150 = vld [vmem:[%s3 + $0x518] sm:$0xff]
    %v1151 = vld [vmem:[%s3 + $0x520] sm:$0xff]
    %v1152 = vld [vmem:[%s3 + $0x528] sm:$0xff]
    %v1153 = vld [vmem:[%s3 + $0x530] sm:$0xff]
    %v1154 = vld [vmem:[%s3 + $0x538] sm:$0xff]
    %v1155 = vld [vmem:[%s3 + $0x540] sm:$0xff]
    %v1156 = vld [vmem:[%s3 + $0x548] sm:$0xff]
    %v1157 = vld [vmem:[%s3 + $0x550] sm:$0xff]
    %v1158 = vld [vmem:[%s3 + $0x558] sm:$0xff]
    %v1159 = vld [vmem:[%s3 + $0x560] sm:$0xff]
    %v1160 = vld [vmem:[%s3 + $0x568] sm:$0xff]
    %v1161 = vld [vmem:[%s3 + $0x570] sm:$0xff]
    %v1162 = vld [vmem:[%s3 + $0x578] sm:$0xff]
    %v1163 = vld [vmem:[%s3 + $0x580] sm:$0xff]
    %v1164 = vld [vmem:[%s3 + $0x588] sm:$0xff]
    %v1165 = vld [vmem:[%s3 + $0x590] sm:$0xff]
    %v1166 = vld [vmem:[%s3 + $0x598] sm:$0xff]
    %v1167 = vld [vmem:[%s3 + $0x5a0] sm:$0xff]
    %v1168 = vld [vmem:[%s3 + $0x5a8] sm:$0xff]
    %v1169 = vld [vmem:[%s3 + $0x5b0] sm:$0xff]
    %v1170 = vld [vmem:[%s3 + $0x5b8] sm:$0xff]
    %v1171 = vld [vmem:[%s3 + $0x5c0] sm:$0xff]
    %v1172 = vld [vmem:[%s3 + $0x5c8] sm:$0xff]
    %v1173 = vld [vmem:[%s3 + $0x5d0] sm:$0xff]
    %v1174 = vld [vmem:[%s3 + $0x5d8] sm:$0xff]
    %v1175 = vld [vmem:[%s3 + $0x5e0] sm:$0xff]
    %v1176 = vld [vmem:[%s3 + $0x5e8] sm:$0xff]
    %v1177 = vld [vmem:[%s3 + $0x5f0] sm:$0xff]
    %v1178 = vld [vmem:[%s3 + $0x5f8] sm:$0xff]
    %v1179 = vld [vmem:[%s3 + $0x600] sm:$0xff]
    %v1180 = vld [vmem:[%s3 + $0x608] sm:$0xff]
    %v1181 = vld [vmem:[%s3 + $0x610] sm:$0xff]
    %v1182 = vld [vmem:[%s3 + $0x618] sm:$0xff]
    %v1183 = vld [vmem:[%s3 + $0x620] sm:$0xff]
    %v1184 = vld [vmem:[%s3 + $0x628] sm:$0xff]
    %v1185 = vld [vmem:[%s3 + $0x630] sm:$0x7f]
    %v1186 = vld [vmem:[%s3 + $0x638] sm:$0x7f]
    %v1191 = vcombine.high %v983, %v983
    %v1192 = vcombine.high %v984, %v984
    %v1193 = vcombine.high %v985, %v985
    %vm1197 = vcmask 252928
    %v1198 = vsel %vm1197, %v986, 0
    %vm1200 = vcmask 1046528
    %v1202 = vsel %vm1200, %v1185, 0
    %v1205 = vsel %vm1200, %v1186, 0
    %1207 = vmatprep.subr.mxu0 %v988
    %1208 = vmatpush1.msra.mxu0 %v987
    %1209 = vmatprep.subr.mxu0 %v990
    %1210 = vmatpush1.msra.mxu0 %v989
    %1211 = vmatprep.subr.mxu0 %v992
    %1212 = vmatpush1.msra.mxu0 %v991
    %1213 = vmatprep.subr.mxu0 %v994
    %1214 = vmatpush1.msra.mxu0 %v993
    %1215 = vmatprep.subr.mxu0 %v996
    %1216 = vmatpush1.msra.mxu0 %v995
    %1217 = vmatprep.subr.mxu0 %v998
    %1218 = vmatpush1.msra.mxu0 %v997
    %1219 = vmatprep.subr.mxu0 %v1000
    %1220 = vmatpush1.msra.mxu0 %v999
    %1221 = vmatprep.subr.mxu0 %v1002
    %1222 = vmatpush1.msra.mxu0 %v1001
    %1223 = vmatprep.subr.mxu0 %v1004
    %1224 = vmatpush1.msra.mxu0 %v1003
    %1225 = vmatprep.subr.mxu0 %v1006
    %1226 = vmatpush1.msra.mxu0 %v1005
    %1227 = vmatprep.subr.mxu0 %v1008
    %1228 = vmatpush1.msra.mxu0 %v1007
    %1229 = vmatprep.subr.mxu0 %v1010
    %1230 = vmatpush1.msra.mxu0 %v1009
    %1231 = vmatprep.subr.mxu0 %v1012
    %1232 = vmatpush1.msra.mxu0 %v1011
    %1233 = vmatprep.subr.mxu0 %v1014
    %1234 = vmatpush1.msra.mxu0 %v1013
    %1235 = vmatprep.subr.mxu0 %v1016
    %1236 = vmatpush1.msra.mxu0 %v1015
    %1237 = vmatprep.subr.mxu0 %v1018
    %1238 = vmatpush1.msra.mxu0 %v1017
    %1239 = vmatprep.subr.mxu0 %v1020
    %1240 = vmatpush1.msra.mxu0 %v1019
    %1241 = vmatprep.subr.mxu0 %v1022
    %1242 = vmatpush1.msra.mxu0 %v1021
    %1243 = vmatprep.subr.mxu0 %v1024
    %1244 = vmatpush1.msra.mxu0 %v1023
    %1245 = vmatprep.subr.mxu0 %v1026
    %1246 = vmatpush1.msra.mxu0 %v1025
    %1247 = vmatprep.subr.mxu0 %v1028
    %1248 = vmatpush1.msra.mxu0 %v1027
    %1249 = vmatprep.subr.mxu0 %v1030
    %1250 = vmatpush1.msra.mxu0 %v1029
    %1251 = vmatprep.subr.mxu0 %v1032
    %1252 = vmatpush1.msra.mxu0 %v1031
    %1253 = vmatprep.subr.mxu0 %v1034
    %1254 = vmatpush1.msra.mxu0 %v1033
    %1255 = vmatprep.subr.mxu0 %v1036
    %1256 = vmatpush1.msra.mxu0 %v1035
    %1257 = vmatprep.subr.mxu0 %v1038
    %1258 = vmatpush1.msra.mxu0 %v1037
    %1259 = vmatprep.subr.mxu0 %v1040
    %1260 = vmatpush1.msra.mxu0 %v1039
    %1261 = vmatprep.subr.mxu0 %v1042
    %1262 = vmatpush1.msra.mxu0 %v1041
    %1263 = vmatprep.subr.mxu0 %v1044
    %1264 = vmatpush1.msra.mxu0 %v1043
    %1265 = vmatprep.subr.mxu0 %v1046
    %1266 = vmatpush1.msra.mxu0 %v1045
    %1267 = vmatprep.subr.mxu0 %v1048
    %1268 = vmatpush1.msra.mxu0 %v1047
    %1269 = vmatprep.subr.mxu0 %v1050
    %1270 = vmatpush1.msra.mxu0 %v1049
    %1271 = vmatprep.mubr.f32.mxu0 %v1191
    %1272 = vmatmul.mubr.f32.gmra.mrb[0].mxu0 %v983
    %v1273 = vpop.f32.mrb[0].mxu0
    %v1274 = vadd.f32 0.0, %v1273
    %v1275 = vpop.f32.mrb[0].mxu0
    %v1276 = vadd.f32 0.0, %v1275
    %1277 = vdwg.mxu0
    %1278 = vmatprep.subr.mxu0 %v1052
    %1279 = vmatpush1.msra.mxu0 %v1051
    %1280 = vmatprep.subr.mxu0 %v1054
    %1281 = vmatpush1.msra.mxu0 %v1053
    %1282 = vmatprep.subr.mxu0 %v1056
    %1283 = vmatpush1.msra.mxu0 %v1055
    %1284 = vmatprep.subr.mxu0 %v1058
    %1285 = vmatpush1.msra.mxu0 %v1057
    %1286 = vmatprep.subr.mxu0 %v1060
    %1287 = vmatpush1.msra.mxu0 %v1059
    %1288 = vmatprep.subr.mxu0 %v1062
    %1289 = vmatpush1.msra.mxu0 %v1061
    %1290 = vmatprep.subr.mxu0 %v1064
    %1291 = vmatpush1.msra.mxu0 %v1063
    %1292 = vmatprep.subr.mxu0 %v1066
    %1293 = vmatpush1.msra.mxu0 %v1065
    %1294 = vmatprep.subr.mxu0 %v1068
    %1295 = vmatpush1.msra.mxu0 %v1067
    %1296 = vmatprep.subr.mxu0 %v1070
    %1297 = vmatpush1.msra.mxu0 %v1069
    %1298 = vmatprep.subr.mxu0 %v1072
    %1299 = vmatpush1.msra.mxu0 %v1071
    %1300 = vmatprep.subr.mxu0 %v1074
    %1301 = vmatpush1.msra.mxu0 %v1073
    %1302 = vmatprep.subr.mxu0 %v1076
    %1303 = vmatpush1.msra.mxu0 %v1075
    %1304 = vmatprep.subr.mxu0 %v1078
    %1305 = vmatpush1.msra.mxu0 %v1077
    %1306 = vmatprep.subr.mxu0 %v1080
    %1307 = vmatpush1.msra.mxu0 %v1079
    %1308 = vmatprep.subr.mxu0 %v1082
    %1309 = vmatpush1.msra.mxu0 %v1081
    %1310 = vmatprep.subr.mxu0 %v1084
    %1311 = vmatpush1.msra.mxu0 %v1083
    %1312 = vmatprep.subr.mxu0 %v1086
    %1313 = vmatpush1.msra.mxu0 %v1085
    %1314 = vmatprep.subr.mxu0 %v1088
    %1315 = vmatpush1.msra.mxu0 %v1087
    %1316 = vmatprep.subr.mxu0 %v1090
    %1317 = vmatpush1.msra.mxu0 %v1089
    %1318 = vmatprep.subr.mxu0 %v1092
    %1319 = vmatpush1.msra.mxu0 %v1091
    %1320 = vmatprep.subr.mxu0 %v1094
    %1321 = vmatpush1.msra.mxu0 %v1093
    %1322 = vmatprep.subr.mxu0 %v1096
    %1323 = vmatpush1.msra.mxu0 %v1095
    %1324 = vmatprep.subr.mxu0 %v1098
    %1325 = vmatpush1.msra.mxu0 %v1097
    %1326 = vmatprep.subr.mxu0 %v1100
    %1327 = vmatpush1.msra.mxu0 %v1099
    %1328 = vmatprep.subr.mxu0 %v1102
    %1329 = vmatpush1.msra.mxu0 %v1101
    %1330 = vmatprep.subr.mxu0 %v1104
    %1331 = vmatpush1.msra.mxu0 %v1103
    %1332 = vmatprep.subr.mxu0 %v1106
    %1333 = vmatpush1.msra.mxu0 %v1105
    %1334 = vmatprep.subr.mxu0 %v1108
    %1335 = vmatpush1.msra.mxu0 %v1107
    %1336 = vmatprep.subr.mxu0 %v1110
    %1337 = vmatpush1.msra.mxu0 %v1109
    %1338 = vmatprep.subr.mxu0 %v1112
    %1339 = vmatpush1.msra.mxu0 %v1111
    %1340 = vmatprep.subr.mxu0 %v1114
    %1341 = vmatpush1.msra.mxu0 %v1113
    %1342 = vmatprep.mubr.f32.mxu0 %v1192
    %1343 = vmatmul.mubr.f32.gmra.mrb[0].mxu0 %v984
    %v1344 = vpop.f32.mrb[0].mxu0
    %v1345 = vadd.f32 %v1274, %v1344
    %v1346 = vpop.f32.mrb[0].mxu0
    %v1347 = vadd.f32 %v1276, %v1346
    %1348 = vdwg.mxu0
    %1349 = vmatprep.subr.mxu0 %v1116
    %1350 = vmatpush1.msra.mxu0 %v1115
    %1351 = vmatprep.subr.mxu0 %v1118
    %1352 = vmatpush1.msra.mxu0 %v1117
    %1353 = vmatprep.subr.mxu0 %v1120
    %1354 = vmatpush1.msra.mxu0 %v1119
    %1355 = vmatprep.subr.mxu0 %v1122
    %1356 = vmatpush1.msra.mxu0 %v1121
    %1357 = vmatprep.subr.mxu0 %v1124
    %1358 = vmatpush1.msra.mxu0 %v1123
    %1359 = vmatprep.subr.mxu0 %v1126
    %1360 = vmatpush1.msra.mxu0 %v1125
    %1361 = vmatprep.subr.mxu0 %v1128
    %1362 = vmatpush1.msra.mxu0 %v1127
    %1363 = vmatprep.subr.mxu0 %v1130
    %1364 = vmatpush1.msra.mxu0 %v1129
    %1365 = vmatprep.subr.mxu0 %v1132
    %1366 = vmatpush1.msra.mxu0 %v1131
    %1367 = vmatprep.subr.mxu0 %v1134
    %1368 = vmatpush1.msra.mxu0 %v1133
    %1369 = vmatprep.subr.mxu0 %v1136
    %1370 = vmatpush1.msra.mxu0 %v1135
    %1371 = vmatprep.subr.mxu0 %v1138
    %1372 = vmatpush1.msra.mxu0 %v1137
    %1373 = vmatprep.subr.mxu0 %v1140
    %1374 = vmatpush1.msra.mxu0 %v1139
    %1375 = vmatprep.subr.mxu0 %v1142
    %1376 = vmatpush1.msra.mxu0 %v1141
    %1377 = vmatprep.subr.mxu0 %v1144
    %1378 = vmatpush1.msra.mxu0 %v1143
    %1379 = vmatprep.subr.mxu0 %v1146
    %1380 = vmatpush1.msra.mxu0 %v1145
    %1381 = vmatprep.subr.mxu0 %v1148
    %1382 = vmatpush1.msra.mxu0 %v1147
    %1383 = vmatprep.subr.mxu0 %v1150
    %1384 = vmatpush1.msra.mxu0 %v1149
    %1385 = vmatprep.subr.mxu0 %v1152
    %1386 = vmatpush1.msra.mxu0 %v1151
    %1387 = vmatprep.subr.mxu0 %v1154
    %1388 = vmatpush1.msra.mxu0 %v1153
    %1389 = vmatprep.subr.mxu0 %v1156
    %1390 = vmatpush1.msra.mxu0 %v1155
    %1391 = vmatprep.subr.mxu0 %v1158
    %1392 = vmatpush1.msra.mxu0 %v1157
    %1393 = vmatprep.subr.mxu0 %v1160
    %1394 = vmatpush1.msra.mxu0 %v1159
    %1395 = vmatprep.subr.mxu0 %v1162
    %1396 = vmatpush1.msra.mxu0 %v1161
    %1397 = vmatprep.subr.mxu0 %v1164
    %1398 = vmatpush1.msra.mxu0 %v1163
    %1399 = vmatprep.subr.mxu0 %v1166
    %1400 = vmatpush1.msra.mxu0 %v1165
    %1401 = vmatprep.subr.mxu0 %v1168
    %1402 = vmatpush1.msra.mxu0 %v1167
    %1403 = vmatprep.subr.mxu0 %v1170
    %1404 = vmatpush1.msra.mxu0 %v1169
    %1405 = vmatprep.subr.mxu0 %v1172
    %1406 = vmatpush1.msra.mxu0 %v1171
    %1407 = vmatprep.subr.mxu0 %v1174
    %1408 = vmatpush1.msra.mxu0 %v1173
    %1409 = vmatprep.subr.mxu0 %v1176
    %1410 = vmatpush1.msra.mxu0 %v1175
    %1411 = vmatprep.subr.mxu0 %v1178
    %1412 = vmatpush1.msra.mxu0 %v1177
    %1413 = vmatprep.mubr.f32.mxu0 %v1193
    %1414 = vmatmul.mubr.f32.gmra.mrb[0].mxu0 %v985
    %v1415 = vpop.f32.mrb[0].mxu0
    %v1416 = vadd.f32 %v1345, %v1415
    %v1417 = vpop.f32.mrb[0].mxu0
    %v1418 = vadd.f32 %v1347, %v1417
    %1419 = vdwg.mxu0
    %1420 = vmatprep.subr.mxu0 %v1180
    %1421 = vmatpush1.msra.mxu0 %v1179
    %1422 = vmatprep.subr.mxu0 %v1182
    %1423 = vmatpush1.msra.mxu0 %v1181
    %1424 = vmatprep.subr.mxu0 %v1184
    %1425 = vmatpush1.msra.mxu0 %v1183
    %1426 = vmatprep.subr.mxu0 %v1205
    %1427 = vmatpush1.msra.mxu0 %v1202
    %1428 = vmatprep.subr.mxu0 0.0
    %1429 = vmatpush1.msra.mxu0 0.0
    %1430 = vmatprep.subr.mxu0 0.0
    %1431 = vmatpush1.msra.mxu0 0.0
    %1432 = vmatprep.subr.mxu0 0.0
    %1433 = vmatpush1.msra.mxu0 0.0
    %1434 = vmatprep.subr.mxu0 0.0
    %1435 = vmatpush1.msra.mxu0 0.0
    %1436 = vmatprep.subr.mxu0 0.0
    %1437 = vmatpush1.msra.mxu0 0.0
    %1438 = vmatprep.subr.mxu0 0.0
    %1439 = vmatpush1.msra.mxu0 0.0
    %1440 = vmatprep.subr.mxu0 0.0
    %1441 = vmatpush1.msra.mxu0 0.0
    %1442 = vmatprep.subr.mxu0 0.0
    %1443 = vmatpush1.msra.mxu0 0.0
    %1444 = vmatprep.subr.mxu0 0.0
    %1445 = vmatpush1.msra.mxu0 0.0
    %1446 = vmatprep.subr.mxu0 0.0
    %1447 = vmatpush1.msra.mxu0 0.0
    %1448 = vmatprep.subr.mxu0 0.0
    %1449 = vmatpush1.msra.mxu0 0.0
    %1450 = vmatprep.subr.mxu0 0.0
    %1451 = vmatpush1.msra.mxu0 0.0
    %1452 = vmatprep.subr.mxu0 0.0
    %1453 = vmatpush1.msra.mxu0 0.0
    %1454 = vmatprep.subr.mxu0 0.0
    %1455 = vmatpush1.msra.mxu0 0.0
    %1456 = vmatprep.subr.mxu0 0.0
    %1457 = vmatpush1.msra.mxu0 0.0
    %1458 = vmatprep.subr.mxu0 0.0
    %1459 = vmatpush1.msra.mxu0 0.0
    %1460 = vmatprep.subr.mxu0 0.0
    %1461 = vmatpush1.msra.mxu0 0.0
    %1462 = vmatprep.subr.mxu0 0.0
    %1463 = vmatpush1.msra.mxu0 0.0
    %1464 = vmatprep.subr.mxu0 0.0
    %1465 = vmatpush1.msra.mxu0 0.0
    %1466 = vmatprep.subr.mxu0 0.0
    %1467 = vmatpush1.msra.mxu0 0.0
    %1468 = vmatprep.subr.mxu0 0.0
    %1469 = vmatpush1.msra.mxu0 0.0
    %1470 = vmatprep.subr.mxu0 0.0
    %1471 = vmatpush1.msra.mxu0 0.0
    %1472 = vmatprep.subr.mxu0 0.0
    %1473 = vmatpush1.msra.mxu0 0.0
    %1474 = vmatprep.subr.mxu0 0.0
    %1475 = vmatpush1.msra.mxu0 0.0
    %1476 = vmatprep.subr.mxu0 0.0
    %1477 = vmatpush1.msra.mxu0 0.0
    %1478 = vmatprep.subr.mxu0 0.0
    %1479 = vmatpush1.msra.mxu0 0.0
    %1480 = vmatprep.subr.mxu0 0.0
    %1481 = vmatpush1.msra.mxu0 0.0
    %1482 = vmatprep.subr.mxu0 0.0
    %1483 = vmatpush1.msra.mxu0 0.0
    %1484 = vmatprep.mubr.f32.mxu0 0.0
    %1485 = vmatmul.mubr.f32.gmra.mrb[0].mxu0 %v1198
    %v1486 = vpop.f32.mrb[0].mxu0
    %v1487 = vadd.f32 %v1416, %v1486
    %v1488 = vpop.f32.mrb[0].mxu0
    %v1489 = vadd.f32 %v1418, %v1488
    %1490 = vdwg.mxu0
    %vm1491 = vcmp.ge.f32.partialorder %v1487, 0.0
    %vm1492 = vcmp.ge.f32.partialorder %v1489, 0.0
    %v1493 = vmul.f32 %v1487, 0.3
    %v1494 = vmul.f32 %v1489, 0.3
    %v1495 = vsel %vm1491, %v1487, %v1493
    %v1496 = vsel %vm1492, %v1489, %v1494
    %v1497 = vpack.c.bf16 %v1495, %v1495
    %v1498 = vpack.c.bf16 %v1496, %v1496
    %v1501 = vcombine.low %v1497, %v1498
    %v1503 = vunpack.c.l.s4 1983009808
    %v1504 = vunpack.c.0.s8 %v1503
    %v1505 = vlaneseq
    %v1506 = vshrl.u32 %v1505, 7
    %v1507 = vsub.s32 %v1504, %v1506
    %v1508 = vrot.slane %v1501, %v1507
    %s1510 = smul.u32 %s857, 2
    %s1511 = smul.addr %s1510, 2
    %s1512 = scalar_lea.vmem %s6, %s1511
    %vm1513 = vcmask 1041408
    %vm1514 = vcmask 330754
    %vm1515 = vmor %vm1514, %vm1513
    %1516 = vst.msk [vmem:[%s1512] sm:$0xf] %vm1515, %v1508
  $region37: #{a_call__.3} parent=0 // loop_footer
    %s861 = sadd.s32 1, %s857
  $region38: #{a_call__.3} parent=0 // loop_footer_branch
    %856 = sbr.rel target = $region34
  $region39: #{a_call__.3} parent=0 // loop_exit
    _
  // Predicated region
  $region40: #{a_call__.3} parent=0 // pred_check
    _
  $region41: #{a_call__.3} parent=0 // pred_check_branch
    %1518 = sbr.rel (0) target = $region43
  $region42: #{a_call__.3} parent=0 // pred_region
    _
  $region43: #{a_call__.3} parent=0 // pred_fallthru
    _
  // Predicated region
  $region44: #{a_call__.3} parent=0 // pred_check
    _
  $region45: #{a_call__.3} parent=0 // pred_check_branch
    %1520 = sbr.rel (0) target = $region47
  $region46: #{a_call__.3} parent=0 // pred_region
    _
  $region47: #{a_call__.3} parent=0 // pred_fallthru
    _

// kernel: a_call__.5
$region0: #{a_call__.5}
  #allocation0 [shape = 'u32[]', space=smem, size = 0x4, offset = 0x4, fixed_abs, tag = 'smem constant byte address 0x4 - core index']
  #allocation1 [shape = 'u32[144,128]{1,0:T(1,128)}', space=vmem, size = 0x12000, scoped, tag = 'internal scratch']
  #allocation2 [shape = 'f32[2,16,16]{2,1,0:T(8,128)}', space=vmem, size = 0x4000, scoped, tag = 'scratch operand']
  #allocation3 [shape = 'bf16[32,16]{1,0:T(16,128)(2,1)}', space=vmem, size = 0x2000, scoped, tag = 'scratch operand']
  %s0 = inlined_call_operand.vmem [shape: bf16[2,8,32], index: 0, kind: input, shape index: {}]
  %s1 = inlined_call_operand.vmem [shape: bf16[16,32], index: 1, kind: input, shape index: {}]
  %s2 = inlined_call_operand.vmem [shape: f32[1,16], index: 2, kind: input, shape index: {}]
  %s3 = inlined_call_operand.vmem [shape: f32[16,4], index: 3, kind: input, shape index: {}]
  %s4 = inlined_call_operand.vmem [shape: f32[16,1], index: 4, kind: input, shape index: {}]
  %s5 = inlined_call_operand.vmem [shape: f32[16,1], index: 5, kind: input, shape index: {}]
  %s6 = inlined_call_operand.vmem [shape: f32[2,16,4], index: 6, kind: output, shape index: {}]
  %s7 = sld [smem:[#allocation0]]
  $region48: #{a_call__.5} parent=0
    _
  %s9 = ssub.s32 1, %s7
  %s10 = scalar_select 0, %s9, %s7
  // Predicated region
  $region2: #{a_call__.5} parent=0 // pred_check
    _
  $region3: #{a_call__.5} parent=0 // pred_check_branch
    %12 = sbr.rel (0) target = $region5
  $region4: #{a_call__.5} parent=0 // pred_region
    _
  $region5: #{a_call__.5} parent=0 // pred_fallthru
    _
  // Predicated region
  $region6: #{a_call__.5} parent=0 // pred_check
    _
  $region7: #{a_call__.5} parent=0 // pred_check_branch
    %14 = sbr.rel (0) target = $region9
  $region8: #{a_call__.5} parent=0 // pred_region
    _
  $region9: #{a_call__.5} parent=0 // pred_fallthru
    _
  // Predicated region
  $region10: #{a_call__.5} parent=0 // pred_check
    _
  $region11: #{a_call__.5} parent=0 // pred_check_branch
    %16 = sbr.rel (0) target = $region13
  $region12: #{a_call__.5} parent=0 // pred_region
    _
  $region13: #{a_call__.5} parent=0 // pred_fallthru
    _
  // Predicated region
  $region14: #{a_call__.5} parent=0 // pred_check
    _
  $region15: #{a_call__.5} parent=0 // pred_check_branch
    %18 = sbr.rel (0) target = $region17
  $region16: #{a_call__.5} parent=0 // pred_region
    _
  $region17: #{a_call__.5} parent=0 // pred_fallthru
    _
  // Predicated region
  $region18: #{a_call__.5} parent=0 // pred_check
    _
  $region19: #{a_call__.5} parent=0 // pred_check_branch
    %20 = sbr.rel (0) target = $region21
  $region20: #{a_call__.5} parent=0 // pred_region
    _
  $region21: #{a_call__.5} parent=0 // pred_fallthru
    _
  // Predicated region
  $region22: #{a_call__.5} parent=0 // pred_check
    _
  $region23: #{a_call__.5} parent=0 // pred_check_branch
    %22 = sbr.rel (0) target = $region25
  $region24: #{a_call__.5} parent=0 // pred_region
    _
  $region25: #{a_call__.5} parent=0 // pred_fallthru
    _
  %v24 = vld [vmem:[%s2] sm:$0x1]
  loop: start=0, step=1, limit=2
  $region26: #{a_call__.5} parent=0 // loop_pre_header
    _
  $region27: #{a_call__.5} parent=0 // loop_header
    %s26 = sphi 0, %s30
    %p27 = scmp.ge.s32.totalorder %s26, 2
    %v31 = vphi 0.0, %v129
    %v32 = vphi 0.0, %v130
    %v33 = vphi 0.0, %v139
    %v34 = vphi 0.0, %v140
  $region28: #{a_call__.5} parent=0 // loop_header_branch
    %29 = sbr.rel (%p27) target = $region32
  $region29: #{a_call__.5} parent=0 // loop_body
    %s35 = smul.addr %s26, 4
    %s36 = scalar_lea.vmem %s0, %s35
    %v37 = vld [vmem:[%s36] sm:$0xf]
    %vm38 = vcmask 125952
    %39 = vst.msk [vmem:[#allocation3] sm:$0xf] %vm38, %v37
    %v41 = vunpack.c.l.b16 %v37
    %v42 = vpack.c.b16 %v41, %v41
    %43 = vrot.lane.b32.xlu0 %v42, 127
    %v44 = vpop.permute.xlu0 %43
    %vm46 = vcmask 130052
    %47 = vst.msk [vmem:[#allocation3] sm:$0xf0] %vm46, %v44
    %48 = vrot.lane.b32.xlu0 %v42, 120
    %v49 = vpop.permute.xlu0 %48
    %51 = vst.msk [vmem:[#allocation3 + $0x8] sm:$0xf] %vm38, %v49
    %52 = vrot.lane.b32.xlu0 %v42, 119
    %v53 = vpop.permute.xlu0 %52
    %55 = vst.msk [vmem:[#allocation3 + $0x8] sm:$0xf0] %vm46, %v53
    %v56 = vld [vmem:[%s1] sm:$0xf]
    %v57 = vld [vmem:[%s1 + $0x4] sm:$0xf]
    %v58 = vld [vmem:[#allocation3] sm:$0xff]
    %v59 = vld [vmem:[#allocation3 + $0x8] sm:$0xff]
    %v62 = vunpack.c.l.b16 %v56
    %v63 = vunpack.c.l.b16 %v57
    %v64 = vpack.c.b16 %v63, %v62
    %vm65 = vcmask 261120
    %v67 = vsel %vm65, %v64, 0
    %69 = vmatprep.subr.bf16.mxu0 0
    %70 = vmatpush1.bf16.msra.mxu0 %v58
    %71 = vmatprep.subr.bf16.mxu0 0
    %72 = vmatpush1.bf16.msra.mxu0 %v59
    %73 = vmatprep.subr.bf16.mxu0 0
    %74 = vmatpush1.bf16.msra.mxu0 0
    %75 = vmatprep.subr.bf16.mxu0 0
    %76 = vmatpush1.bf16.msra.mxu0 0
    %77 = vmatprep.subr.bf16.mxu0 0
    %78 = vmatpush1.bf16.msra.mxu0 0
    %79 = vmatprep.subr.bf16.mxu0 0
    %80 = vmatpush1.bf16.msra.mxu0 0
    %81 = vmatprep.subr.bf16.mxu0 0
    %82 = vmatpush1.bf16.msra.mxu0 0
    %83 = vmatprep.subr.bf16.mxu0 0
    %84 = vmatpush1.bf16.msra.mxu0 0
    %85 = vmatprep.subr.bf16.mxu0 0
    %86 = vmatpush1.bf16.msra.mxu0 0
    %87 = vmatprep.subr.bf16.mxu0 0
    %88 = vmatpush1.bf16.msra.mxu0 0
    %89 = vmatprep.subr.bf16.mxu0 0
    %90 = vmatpush1.bf16.msra.mxu0 0
    %91 = vmatprep.subr.bf16.mxu0 0
    %92 = vmatpush1.bf16.msra.mxu0 0
    %93 = vmatprep.subr.bf16.mxu0 0
    %94 = vmatpush1.bf16.msra.mxu0 0
    %95 = vmatprep.subr.bf16.mxu0 0
    %96 = vmatpush1.bf16.msra.mxu0 0
    %97 = vmatprep.subr.bf16.mxu0 0
    %98 = vmatpush1.bf16.msra.mxu0 0
    %99 = vmatprep.subr.bf16.mxu0 0
    %100 = vmatpush1.bf16.msra.mxu0 0
    %101 = vmatprep.mubr.bf16.mxu0 0
    %102 = vmatmul.mubr.bf16.gmra.mrb[0].mxu0 %v67
    %v103 = vpop.f32.mrb[0].mxu0
    %v104 = vadd.f32 0.0, %v103
    %v105 = vpop.f32.mrb[0].mxu0
    %v106 = vpop.f32.mrb[0].mxu0
    %v107 = vadd.f32 0.0, %v106
    %v108 = vpop.f32.mrb[0].mxu0
    %109 = vdwg.mxu0
    %s110 = smul.u32 %s26, 16
    %s111 = scalar_lea.vmem [#allocation2], %s110
    %vm112 = vcmask 130048
    %113 = vst.msk [vmem:[%s111] sm:$0xff] %vm112, %v104
    %114 = vst.msk [vmem:[%s111 + $0x8] sm:$0xff] %vm112, %v107
    %v116 = vlaneseq
    %v117 = vshrl.u32 %v116, 7
    %v118 = vsub.s32 0, %v117
    %v119 = vrot.slane %v24, %v118
    %v121 = vmul.f32 %v104, %v119
    %v122 = vmul.f32 %v107, %v119
    %v123 = vsel %vm112, %v121, 0.0
    %124 = vadd.xlane.f32.xlu0 %v123
    %v125 = vpop.xlane.xlu0 %124
    %v126 = vsel %vm112, %v122, 0.0
    %127 = vadd.xlane.f32.xlu0 %v126
    %v128 = vpop.xlane.xlu0 %127
    %v129 = vadd.f32 %v31, %v125
    %v130 = vadd.f32 %v32, %v128
    %v131 = vmul.f32 %v121, %v104
    %v132 = vmul.f32 %v122, %v107
    %v133 = vsel %vm112, %v131, 0.0
    %134 = vadd.xlane.f32.xlu0 %v133
    %v135 = vpop.xlane.xlu0 %134
    %v136 = vsel %vm112, %v132, 0.0
    %137 = vadd.xlane.f32.xlu0 %v136
    %v138 = vpop.xlane.xlu0 %137
    %v139 = vadd.f32 %v33, %v135
    %v140 = vadd.f32 %v34, %v138
  $region30: #{a_call__.5} parent=0 // loop_footer
    %s30 = sadd.s32 1, %s26
  $region31: #{a_call__.5} parent=0 // loop_footer_branch
    %25 = sbr.rel target = $region27
  $region32: #{a_call__.5} parent=0 // loop_exit
    _
  %v141 = vmul.f32 %v31, 0.125
  %v142 = vmul.f32 %v32, 0.125
  %v143 = vmul.f32 %v33, 0.125
  %v144 = vmul.f32 %v34, 0.125
  %v145 = vmul.f32 %v141, %v141
  %v146 = vmul.f32 %v142, %v142
  %v147 = vsub.f32 %v143, %v145
  %v148 = vsub.f32 %v144, %v146
  %v149 = vmax.f32 %v147, 0.0
  %v150 = vmax.f32 %v148, 0.0
  %v151 = vld [vmem:[%s4] sm:$0xff]
  %v152 = vld [vmem:[%s4 + $0x8] sm:$0xff]
  %v153 = vadd.f32 %v149, 1e-05
  %v154 = vadd.f32 %v150, 1e-05
  %v155 = vrsqrt.pop %v153
  %v156 = vrsqrt.pop %v154
  %v157 = vmul.f32 %v151, %v155
  %v158 = vmul.f32 %v152, %v156
  %v159 = vld [vmem:[%s5] sm:$0xff]
  %v160 = vld [vmem:[%s5 + $0x8] sm:$0xff]
  %v161 = vmul.f32 %v141, %v157
  %v162 = vmul.f32 %v142, %v158
  %v163 = vsub.f32 %v159, %v161
  %v164 = vsub.f32 %v160, %v162
  loop: start=0, step=1, limit=2
  $region33: #{a_call__.5} parent=0 // loop_pre_header
    _
  $region34: #{a_call__.5} parent=0 // loop_header
    %s166 = sphi 0, %s170
    %p167 = scmp.ge.s32.totalorder %s166, 2
  $region35: #{a_call__.5} parent=0 // loop_header_branch
    %169 = sbr.rel (%p167) target = $region39
  $region36: #{a_call__.5} parent=0 // loop_body
    %s171 = smul.u32 %s166, 16
    %s172 = scalar_lea.vmem [#allocation2], %s171
    %v173 = vld [vmem:[%s172] sm:$0xff]
    %v174 = vld [vmem:[%s172 + $0x8] sm:$0xff]
    %176 = vset.pattern.permute.xlu0 0
    %177 = vperm.xlu0 %176, %v157
    %v178 = vpop.permute.xlu0 %177
    %181 = vset.pattern.permute.xlu0 0
    %182 = vperm.xlu0 %181, %v158
    %v183 = vpop.permute.xlu0 %182
    %v185 = vmul.f32 %v173, %v178
    %v186 = vmul.f32 %v174, %v183
    %188 = vset.pattern.permute.xlu0 0
    %189 = vperm.xlu0 %188, %v163
    %v190 = vpop.permute.xlu0 %189
    %193 = vset.pattern.permute.xlu0 0
    %194 = vperm.xlu0 %193, %v164
    %v195 = vpop.permute.xlu0 %194
    %v197 = vadd.f32 %v185, %v190
    %v198 = vadd.f32 %v186, %v195
    %v199 = vld [vmem:[%s3] sm:$0xff]
    %v200 = vld [vmem:[%s3 + $0x8] sm:$0xff]
    %vm201 = vcmask 130048
    %v203 = vsel %vm201, %v197, 0
    %v206 = vsel %vm201, %v198, 0
    %208 = vmatprep.subr.mxu0 0.0
    %209 = vmatpush1.msra.mxu0 %v199
    %210 = vmatprep.subr.mxu0 0.0
    %211 = vmatpush1.msra.mxu0 %v200
    %212 = vmatprep.subr.mxu0 0.0
    %213 = vmatpush1.msra.mxu0 0.0
    %214 = vmatprep.subr.mxu0 0.0
    %215 = vmatpush1.msra.mxu0 0.0
    %216 = vmatprep.subr.mxu0 0.0
    %217 = vmatpush1.msra.mxu0 0.0
    %218 = vmatprep.subr.mxu0 0.0
    %219 = vmatpush1.msra.mxu0 0.0
    %220 = vmatprep.subr.mxu0 0.0
    %221 = vmatpush1.msra.mxu0 0.0
    %222 = vmatprep.subr.mxu0 0.0
    %223 = vmatpush1.msra.mxu0 0.0
    %224 = vmatprep.subr.mxu0 0.0
    %225 = vmatpush1.msra.mxu0 0.0
    %226 = vmatprep.subr.mxu0 0.0
    %227 = vmatpush1.msra.mxu0 0.0
    %228 = vmatprep.subr.mxu0 0.0
    %229 = vmatpush1.msra.mxu0 0.0
    %230 = vmatprep.subr.mxu0 0.0
    %231 = vmatpush1.msra.mxu0 0.0
    %232 = vmatprep.subr.mxu0 0.0
    %233 = vmatpush1.msra.mxu0 0.0
    %234 = vmatprep.subr.mxu0 0.0
    %235 = vmatpush1.msra.mxu0 0.0
    %236 = vmatprep.subr.mxu0 0.0
    %237 = vmatpush1.msra.mxu0 0.0
    %238 = vmatprep.subr.mxu0 0.0
    %239 = vmatpush1.msra.mxu0 0.0
    %240 = vmatprep.subr.mxu0 0.0
    %241 = vmatpush1.msra.mxu0 0.0
    %242 = vmatprep.subr.mxu0 0.0
    %243 = vmatpush1.msra.mxu0 0.0
    %244 = vmatprep.subr.mxu0 0.0
    %245 = vmatpush1.msra.mxu0 0.0
    %246 = vmatprep.subr.mxu0 0.0
    %247 = vmatpush1.msra.mxu0 0.0
    %248 = vmatprep.subr.mxu0 0.0
    %249 = vmatpush1.msra.mxu0 0.0
    %250 = vmatprep.subr.mxu0 0.0
    %251 = vmatpush1.msra.mxu0 0.0
    %252 = vmatprep.subr.mxu0 0.0
    %253 = vmatpush1.msra.mxu0 0.0
    %254 = vmatprep.subr.mxu0 0.0
    %255 = vmatpush1.msra.mxu0 0.0
    %256 = vmatprep.subr.mxu0 0.0
    %257 = vmatpush1.msra.mxu0 0.0
    %258 = vmatprep.subr.mxu0 0.0
    %259 = vmatpush1.msra.mxu0 0.0
    %260 = vmatprep.subr.mxu0 0.0
    %261 = vmatpush1.msra.mxu0 0.0
    %262 = vmatprep.subr.mxu0 0.0
    %263 = vmatpush1.msra.mxu0 0.0
    %264 = vmatprep.subr.mxu0 0.0
    %265 = vmatpush1.msra.mxu0 0.0
    %266 = vmatprep.subr.mxu0 0.0
    %267 = vmatpush1.msra.mxu0 0.0
    %268 = vmatprep.subr.mxu0 0.0
    %269 = vmatpush1.msra.mxu0 0.0
    %270 = vmatprep.subr.mxu0 0.0
    %271 = vmatpush1.msra.mxu0 0.0
    %272 = vmatprep.mubr.f32.mxu0 0.0
    %273 = vmatmul.mubr.f32.gmra.mrb[0].mxu0 %v203
    %v274 = vpop.f32.mrb[0].mxu0
    %v275 = vadd.f32 0.0, %v274
    %v276 = vpop.f32.mrb[0].mxu0
    %277 = vmatprep.mubr.f32.mxu0 0.0
    %278 = vmatmul.mubr.f32.gmra.mrb[0].mxu0 %v206
    %v279 = vpop.f32.mrb[0].mxu0
    %v280 = vadd.f32 0.0, %v279
    %v281 = vpop.f32.mrb[0].mxu0
    %282 = vdwg.mxu0
    %vm283 = vcmp.ge.f32.partialorder %v275, 0.0
    %vm284 = vcmp.ge.f32.partialorder %v280, 0.0
    %v285 = vmul.f32 %v275, 0.3
    %v286 = vmul.f32 %v280, 0.3
    %v287 = vsel %vm283, %v275, %v285
    %v288 = vsel %vm284, %v280, %v286
    %s289 = scalar_lea.vmem %s6, %s171
    %vm290 = vcmask 31744
    %291 = vst.msk [vmem:[%s289] sm:$0xff] %vm290, %v287
    %292 = vst.msk [vmem:[%s289 + $0x8] sm:$0xff] %vm290, %v288
  $region37: #{a_call__.5} parent=0 // loop_footer
    %s170 = sadd.s32 1, %s166
  $region38: #{a_call__.5} parent=0 // loop_footer_branch
    %165 = sbr.rel target = $region34
  $region39: #{a_call__.5} parent=0 // loop_exit
    _
  // Predicated region
  $region40: #{a_call__.5} parent=0 // pred_check
    _
  $region41: #{a_call__.5} parent=0 // pred_check_branch
    %294 = sbr.rel (0) target = $region43
  $region42: #{a_call__.5} parent=0 // pred_region
    _
  $region43: #{a_call__.5} parent=0 // pred_fallthru
    _
  // Predicated region
  $region44: #{a_call__.5} parent=0 // pred_check
    _
  $region45: #{a_call__.5} parent=0 // pred_check_branch
    %296 = sbr.rel (0) target = $region47
  $region46: #{a_call__.5} parent=0 // pred_region
    _
  $region47: #{a_call__.5} parent=0 // pred_fallthru
    _

</llo_original>
